<compile_context>
chip_gen: v6e
topology: v6e:2x2x1
jax: 0.10.0
libtpu: 0.0.40
codegen_flags: <defaults>
</compile_context>

<pallas_src>
import functools

import jax
import jax.numpy as jnp
from jax.experimental import pallas as pl
from jax.experimental.pallas import tpu as pltpu


def _round_up(x: int, m: int) -> int:
    return ((x + m - 1) // m) * m


# ---------------------------------------------------------------------------
# Pallas kernel: fused (patches @ scaled-weights) + bias + SiLU
# ---------------------------------------------------------------------------
def _mm_bias_silu_kernel(a_ref, w_ref, b_ref, o_ref):
    # a_ref: (TM, Kp) bf16   im2col patch rows (one M tile)
    # w_ref: (Kp, Np) bf16   conv weights with BN scale folded in
    # b_ref: (1,  Np) f32    folded BN bias
    # o_ref: (TM, Np) bf16
    acc = jnp.dot(a_ref[...], w_ref[...], preferred_element_type=jnp.float32)
    y = acc + b_ref[...]
    # SiLU: y * sigmoid(y); exp -> EUP, approx reciprocal -> EUP (keeps VALU free)
    sig = pl.reciprocal(1.0 + jnp.exp(-y), approx=True)
    o_ref[...] = (y * sig).astype(o_ref.dtype)


def _fused_matmul_bias_silu(patches, w, bias, tm):
    """patches (Mp,Kp) bf16, w (Kp,Np) bf16, bias (1,Np) f32 -> (Mp,Np) bf16."""
    mp, kp = patches.shape
    kw, np_ = w.shape
    assert kp == kw and mp % tm == 0 and np_ % 128 == 0

    cost = pl.CostEstimate(
        flops=int(2 * mp * kp * np_),
        transcendentals=int(mp * np_),            # exp per output element
        bytes_accessed=int(patches.size * 2 + w.size * 2 + bias.size * 4
                           + mp * np_ * 2),
    )

    return pl.pallas_call(
        _mm_bias_silu_kernel,
        out_shape=jax.ShapeDtypeStruct((mp, np_), jnp.bfloat16),
        grid_spec=pltpu.PrefetchScalarGridSpec(
            num_scalar_prefetch=0,
            grid=(mp // tm,),
            in_specs=[
                pl.BlockSpec((tm, kp), lambda i: (i, 0)),   # M-tiled patches
                pl.BlockSpec((kp, np_), lambda i: (0, 0)),  # full weights, resident
                pl.BlockSpec((1, np_), lambda i: (0, 0)),   # bias, resident
            ],
            out_specs=pl.BlockSpec((tm, np_), lambda i: (i, 0)),
        ),
        compiler_params=pltpu.CompilerParams(
            dimension_semantics=("parallel",),              # shard M across TCs
            vmem_limit_bytes=64 * 1024 * 1024,              # v7x-safe budget
        ),
        cost_estimate=cost,
    )(patches, w, bias)


# ---------------------------------------------------------------------------
# im2col glue (plain JAX, NHWC): 3x3, stride 2, pad 1 -> (M, 9*C) bf16 patches
# ---------------------------------------------------------------------------
def _im2col_3x3_s2_nhwc(x_nhwc):
    n, h, w, c = x_nhwc.shape
    k, s, p = 3, 2, 1
    xp = jnp.pad(x_nhwc, ((0, 0), (p, p), (p, p), (0, 0)))
    ho = (h + 2 * p - k) // s + 1
    wo = (w + 2 * p - k) // s + 1
    cols = []
    for dy in range(k):
        for dx in range(k):
            cols.append(xp[:, dy:dy + ho * s:s, dx:dx + wo * s:s, :])
    # K index order = (kh, kw, Cin); emit bf16 to halve HBM traffic
    patches = jnp.stack(cols, axis=-2).reshape(n * ho * wo, k * k * c)
    return patches.astype(jnp.bfloat16), (n, ho, wo)


def _conv_stage_nhwc(x_nhwc, w_oikk, gamma, beta, mean, var, eps=1e-5):
    """3x3 stride-2 conv (no bias) + BatchNorm (eval) + SiLU, NHWC in/out (bf16)."""
    cout, cin, kh, kw = w_oikk.shape
    assert x_nhwc.shape[-1] == cin

    patches, (n, ho, wo) = _im2col_3x3_s2_nhwc(x_nhwc)
    m, k = patches.shape
    kp = _round_up(k, 128)
    np_ = _round_up(cout, 128)

    # Fold BN: scale goes into the weights, bias stays for the kernel epilogue.
    scale = gamma * jax.lax.rsqrt(var + eps)
    bias = (beta - mean * scale).astype(jnp.float32)

    # (Cout, Cin, kh, kw) -> (kh, kw, Cin, Cout) -> (K, Cout), scale-fold, pad to
    # lane/contraction-dense (Kp, Np), cast bf16.
    w2d = jnp.transpose(w_oikk, (2, 3, 1, 0)).reshape(k, cout) * scale[None, :]
    w2d = jnp.pad(w2d, ((0, kp - k), (0, np_ - cout))).astype(jnp.bfloat16)
    bias_p = jnp.pad(bias, (0, np_ - cout)).reshape(1, np_)

    if kp > k:
        patches = jnp.pad(patches, ((0, 0), (0, kp - k)))

    # M tiling: big tiles for pipelining, rounded to sublane multiples.
    tm = min(512, _round_up(m, 8))
    mp = _round_up(m, tm)
    if mp > m:
        patches = jnp.pad(patches, ((0, mp - m), (0, 0)))

    out = _fused_matmul_bias_silu(patches, w2d, bias_p, tm)   # (Mp, Np) bf16
    out = out[:m, :cout].reshape(n, ho, wo, cout)
    return out


# ---------------------------------------------------------------------------
# Synthetic EfficientNet-style encoder (5 downsampling stages)
# ---------------------------------------------------------------------------
STAGE_CHANNELS = (16, 24, 40, 56, 80)   # scaled-down b0-like out_channels


def init_encoder_params(key, in_channels):
    params = []
    cin = in_channels
    for i, cout in enumerate(STAGE_CHANNELS):
        k = jax.random.fold_in(key, i)
        kw_, kg, kb, km, kv = jax.random.split(k, 5)
        w = jax.random.normal(kw_, (cout, cin, 3, 3), jnp.float32) * 0.1
        gamma = 1.0 + 0.05 * jax.random.normal(kg, (cout,), jnp.float32)
        beta = 0.05 * jax.random.normal(kb, (cout,), jnp.float32)
        mean = 0.05 * jax.random.normal(km, (cout,), jnp.float32)
        var = jnp.abs(jax.random.normal(kv, (cout,), jnp.float32)) * 0.1 + 1.0
        params.append(dict(w=w, gamma=gamma, beta=beta, mean=mean, var=var))
        cin = cout
    return params


@functools.partial(jax.jit, static_argnames=("return_intermediate_layers",))
def unetpp_efficientnet_forward(x, params, return_intermediate_layers=False):
    """Matches UNETPPEfficientNet.forward: encoder features only.

    features = [x, f1(/2), f2(/4), f3(/8), f4(/16), f5(/32)]
    """
    x_nhwc = jnp.transpose(x, (0, 2, 3, 1))          # single entry transpose
    feats_nhwc = []
    h = x_nhwc
    for p in params:
        h = _conv_stage_nhwc(h, p["w"], p["gamma"], p["beta"], p["mean"], p["var"])
        feats_nhwc.append(h)

    def to_nchw(f):
        return jnp.transpose(f, (0, 3, 1, 2)).astype(x.dtype)

    if return_intermediate_layers:
        # features[:5] = (x, /2, /4, /8, /16)
        return (x,) + tuple(to_nchw(f) for f in feats_nhwc[:4])
    return to_nchw(feats_nhwc[-1])


# ---------------------------------------------------------------------------
if __name__ == "__main__":
    key = jax.random.PRNGKey(0)
    kx, kp = jax.random.split(key)

    batch, in_channels, spatial = 2, 3, 32
    x = jax.random.normal(kx, (batch, in_channels, spatial, spatial), jnp.float32)
    params = init_encoder_params(kp, in_channels)

    # default forward: deepest encoder feature (stride /32)
    deepest = unetpp_efficientnet_forward(x, params)
    deepest = jax.block_until_ready(deepest)
    assert deepest.shape == (batch, STAGE_CHANNELS[-1], spatial // 32, spatial // 32)
    assert deepest.dtype == x.dtype

    # intermediate layers path (first 5 features: x, /2, /4, /8, /16)
    inter = unetpp_efficientnet_forward(x, params, return_intermediate_layers=True)
    inter = jax.block_until_ready(inter)
    assert len(inter) == 5
    assert inter[0].shape == x.shape
    for i, c in enumerate(STAGE_CHANNELS[:4]):
        s = spatial // (2 ** (i + 1))
        assert inter[i + 1].shape == (batch, c, s, s)

    print("KERNEL_OK")
</pallas_src>

<mosaic_0001>
module attributes {stable_mosaic.version = 11 : i64} {
  func.func @_mm_bias_silu_kernel(%arg0: i32, %arg1: memref<512x128xbf16, #tpu.memory_space<vmem>>, %arg2: memref<128x128xbf16, #tpu.memory_space<vmem>>, %arg3: memref<1x128xf32, #tpu.memory_space<vmem>>, %arg4: memref<512x128xbf16, #tpu.memory_space<vmem>>) attributes {dimension_semantics = [#tpu.dimension_semantics<parallel>], iteration_bounds = array<i64: 1>, scalar_prefetch = 0 : i64, scratch_operands = 0 : i64, tpu.core_type = #tpu.core_type<tc>, window_params = [{transform_indices = @transform_0, window_bounds = array<i64: 512, 128>}, {pipeline_mode = #tpu.pipeline_mode<synchronous>, transform_indices = @transform_1, window_bounds = array<i64: 128, 128>}, {pipeline_mode = #tpu.pipeline_mode<synchronous>, transform_indices = @transform_2, window_bounds = array<i64: 1, 128>}, {transform_indices = @transform_3, window_bounds = array<i64: 512, 128>}]} {
    %c0 = arith.constant 0 : index
    %c0_0 = arith.constant 0 : index
    %0 = vector.load %arg1[%c0, %c0_0] : memref<512x128xbf16, #tpu.memory_space<vmem>>, vector<512x128xbf16>
    %c0_1 = arith.constant 0 : index
    %c0_2 = arith.constant 0 : index
    %1 = vector.load %arg2[%c0_1, %c0_2] : memref<128x128xbf16, #tpu.memory_space<vmem>>, vector<128x128xbf16>
    %cst = arith.constant dense<0.000000e+00> : vector<512x128xf32>
    %2 = tpu.matmul %0, %1, %cst {dimension_numbers = #tpu.dot_dimension_numbers<[1], [0], [0], [1], [0, 0, 1, 1], [], []>} : vector<512x128xbf16>, vector<128x128xbf16>, vector<512x128xf32> -> vector<512x128xf32>
    %c0_3 = arith.constant 0 : index
    %c0_4 = arith.constant 0 : index
    %3 = vector.load %arg3[%c0_3, %c0_4] : memref<1x128xf32, #tpu.memory_space<vmem>>, vector<1x128xf32>
    %4 = vector.broadcast %3 : vector<1x128xf32> to vector<512x128xf32>
    %5 = arith.addf %2, %4 : vector<512x128xf32>
    %cst_5 = arith.constant 0.000000e+00 : f32
    %6 = vector.broadcast %cst_5 : f32 to vector<512x128xf32>
    %7 = arith.subf %6, %5 : vector<512x128xf32>
    %8 = math.exp %7 : vector<512x128xf32>
    %cst_6 = arith.constant 1.000000e+00 : f32
    %9 = vector.broadcast %cst_6 : f32 to vector<512x128xf32>
    %10 = arith.addf %9, %8 : vector<512x128xf32>
    %11 = tpu.reciprocal %10 {approx = true} : vector<512x128xf32> -> vector<512x128xf32>
    %12 = arith.mulf %5, %11 : vector<512x128xf32>
    %13 = arith.truncf %12 : vector<512x128xf32> to vector<512x128xbf16>
    %c0_7 = arith.constant 0 : index
    %c0_8 = arith.constant 0 : index
    %14 = vector.load %arg4[%c0_7, %c0_8] : memref<512x128xbf16, #tpu.memory_space<vmem>>, vector<512x128xbf16>
    tpu.vector_store %arg4[%c0_7, %c0_8], %13 {strides = array<i32>} : memref<512x128xbf16, #tpu.memory_space<vmem>>, vector<512x128xbf16>,
    return
  }
  func.func @transform_0(%arg0: i32) -> (i32, i32) {
    %c0_i32 = arith.constant 0 : i32
    %c0_i32_0 = arith.constant 0 : i32
    return %arg0, %c0_i32 : i32, i32
  }
  func.func @transform_1(%arg0: i32) -> (i32, i32) {
    %c0_i32 = arith.constant 0 : i32
    %c0_i32_0 = arith.constant 0 : i32
    %c0_i32_1 = arith.constant 0 : i32
    return %c0_i32, %c0_i32_0 : i32, i32
  }
  func.func @transform_2(%arg0: i32) -> (i32, i32) {
    %c0_i32 = arith.constant 0 : i32
    %c0_i32_0 = arith.constant 0 : i32
    %c0_i32_1 = arith.constant 0 : i32
    return %c0_i32, %c0_i32_0 : i32, i32
  }
  func.func @transform_3(%arg0: i32) -> (i32, i32) {
    %c0_i32 = arith.constant 0 : i32
    %c0_i32_0 = arith.constant 0 : i32
    return %arg0, %c0_i32 : i32, i32
  }
}

module attributes {stable_mosaic.version = 11 : i64} {
  func.func @_mm_bias_silu_kernel(%arg0: i32, %arg1: memref<128x256xbf16, #tpu.memory_space<vmem>>, %arg2: memref<256x128xbf16, #tpu.memory_space<vmem>>, %arg3: memref<1x128xf32, #tpu.memory_space<vmem>>, %arg4: memref<128x128xbf16, #tpu.memory_space<vmem>>) attributes {dimension_semantics = [#tpu.dimension_semantics<parallel>], iteration_bounds = array<i64: 1>, scalar_prefetch = 0 : i64, scratch_operands = 0 : i64, tpu.core_type = #tpu.core_type<tc>, window_params = [{transform_indices = @transform_0, window_bounds = array<i64: 128, 256>}, {pipeline_mode = #tpu.pipeline_mode<synchronous>, transform_indices = @transform_1, window_bounds = array<i64: 256, 128>}, {pipeline_mode = #tpu.pipeline_mode<synchronous>, transform_indices = @transform_2, window_bounds = array<i64: 1, 128>}, {transform_indices = @transform_3, window_bounds = array<i64: 128, 128>}]} {
    %c0 = arith.constant 0 : index
    %c0_0 = arith.constant 0 : index
    %0 = vector.load %arg1[%c0, %c0_0] : memref<128x256xbf16, #tpu.memory_space<vmem>>, vector<128x256xbf16>
    %c0_1 = arith.constant 0 : index
    %c0_2 = arith.constant 0 : index
    %1 = vector.load %arg2[%c0_1, %c0_2] : memref<256x128xbf16, #tpu.memory_space<vmem>>, vector<256x128xbf16>
    %cst = arith.constant dense<0.000000e+00> : vector<128x128xf32>
    %2 = tpu.matmul %0, %1, %cst {dimension_numbers = #tpu.dot_dimension_numbers<[1], [0], [0], [1], [0, 0, 1, 1], [], []>} : vector<128x256xbf16>, vector<256x128xbf16>, vector<128x128xf32> -> vector<128x128xf32>
    %c0_3 = arith.constant 0 : index
    %c0_4 = arith.constant 0 : index
    %3 = vector.load %arg3[%c0_3, %c0_4] : memref<1x128xf32, #tpu.memory_space<vmem>>, vector<1x128xf32>
    %4 = vector.broadcast %3 : vector<1x128xf32> to vector<128x128xf32>
    %5 = arith.addf %2, %4 : vector<128x128xf32>
    %cst_5 = arith.constant 0.000000e+00 : f32
    %6 = vector.broadcast %cst_5 : f32 to vector<128x128xf32>
    %7 = arith.subf %6, %5 : vector<128x128xf32>
    %8 = math.exp %7 : vector<128x128xf32>
    %cst_6 = arith.constant 1.000000e+00 : f32
    %9 = vector.broadcast %cst_6 : f32 to vector<128x128xf32>
    %10 = arith.addf %9, %8 : vector<128x128xf32>
    %11 = tpu.reciprocal %10 {approx = true} : vector<128x128xf32> -> vector<128x128xf32>
    %12 = arith.mulf %5, %11 : vector<128x128xf32>
    %13 = arith.truncf %12 : vector<128x128xf32> to vector<128x128xbf16>
    %c0_7 = arith.constant 0 : index
    %c0_8 = arith.constant 0 : index
    %14 = vector.load %arg4[%c0_7, %c0_8] : memref<128x128xbf16, #tpu.memory_space<vmem>>, vector<128x128xbf16>
    tpu.vector_store %arg4[%c0_7, %c0_8], %13 {strides = array<i32>} : memref<128x128xbf16, #tpu.memory_space<vmem>>, vector<128x128xbf16>,
    return
  }
  func.func @transform_0(%arg0: i32) -> (i32, i32) {
    %c0_i32 = arith.constant 0 : i32
    %c0_i32_0 = arith.constant 0 : i32
    return %arg0, %c0_i32 : i32, i32
  }
  func.func @transform_1(%arg0: i32) -> (i32, i32) {
    %c0_i32 = arith.constant 0 : i32
    %c0_i32_0 = arith.constant 0 : i32
    %c0_i32_1 = arith.constant 0 : i32
    return %c0_i32, %c0_i32_0 : i32, i32
  }
  func.func @transform_2(%arg0: i32) -> (i32, i32) {
    %c0_i32 = arith.constant 0 : i32
    %c0_i32_0 = arith.constant 0 : i32
    %c0_i32_1 = arith.constant 0 : i32
    return %c0_i32, %c0_i32_0 : i32, i32
  }
  func.func @transform_3(%arg0: i32) -> (i32, i32) {
    %c0_i32 = arith.constant 0 : i32
    %c0_i32_0 = arith.constant 0 : i32
    return %arg0, %c0_i32 : i32, i32
  }
}

module attributes {stable_mosaic.version = 11 : i64} {
  func.func @_mm_bias_silu_kernel(%arg0: i32, %arg1: memref<32x256xbf16, #tpu.memory_space<vmem>>, %arg2: memref<256x128xbf16, #tpu.memory_space<vmem>>, %arg3: memref<1x128xf32, #tpu.memory_space<vmem>>, %arg4: memref<32x128xbf16, #tpu.memory_space<vmem>>) attributes {dimension_semantics = [#tpu.dimension_semantics<parallel>], iteration_bounds = array<i64: 1>, scalar_prefetch = 0 : i64, scratch_operands = 0 : i64, tpu.core_type = #tpu.core_type<tc>, window_params = [{transform_indices = @transform_0, window_bounds = array<i64: 32, 256>}, {pipeline_mode = #tpu.pipeline_mode<synchronous>, transform_indices = @transform_1, window_bounds = array<i64: 256, 128>}, {pipeline_mode = #tpu.pipeline_mode<synchronous>, transform_indices = @transform_2, window_bounds = array<i64: 1, 128>}, {transform_indices = @transform_3, window_bounds = array<i64: 32, 128>}]} {
    %c0 = arith.constant 0 : index
    %c0_0 = arith.constant 0 : index
    %0 = vector.load %arg1[%c0, %c0_0] : memref<32x256xbf16, #tpu.memory_space<vmem>>, vector<32x256xbf16>
    %c0_1 = arith.constant 0 : index
    %c0_2 = arith.constant 0 : index
    %1 = vector.load %arg2[%c0_1, %c0_2] : memref<256x128xbf16, #tpu.memory_space<vmem>>, vector<256x128xbf16>
    %cst = arith.constant dense<0.000000e+00> : vector<32x128xf32>
    %2 = tpu.matmul %0, %1, %cst {dimension_numbers = #tpu.dot_dimension_numbers<[1], [0], [0], [1], [0, 0, 1, 1], [], []>} : vector<32x256xbf16>, vector<256x128xbf16>, vector<32x128xf32> -> vector<32x128xf32>
    %c0_3 = arith.constant 0 : index
    %c0_4 = arith.constant 0 : index
    %3 = vector.load %arg3[%c0_3, %c0_4] : memref<1x128xf32, #tpu.memory_space<vmem>>, vector<1x128xf32>
    %4 = vector.broadcast %3 : vector<1x128xf32> to vector<32x128xf32>
    %5 = arith.addf %2, %4 : vector<32x128xf32>
    %cst_5 = arith.constant 0.000000e+00 : f32
    %6 = vector.broadcast %cst_5 : f32 to vector<32x128xf32>
    %7 = arith.subf %6, %5 : vector<32x128xf32>
    %8 = math.exp %7 : vector<32x128xf32>
    %cst_6 = arith.constant 1.000000e+00 : f32
    %9 = vector.broadcast %cst_6 : f32 to vector<32x128xf32>
    %10 = arith.addf %9, %8 : vector<32x128xf32>
    %11 = tpu.reciprocal %10 {approx = true} : vector<32x128xf32> -> vector<32x128xf32>
    %12 = arith.mulf %5, %11 : vector<32x128xf32>
    %13 = arith.truncf %12 : vector<32x128xf32> to vector<32x128xbf16>
    %c0_7 = arith.constant 0 : index
    %c0_8 = arith.constant 0 : index
    %14 = vector.load %arg4[%c0_7, %c0_8] : memref<32x128xbf16, #tpu.memory_space<vmem>>, vector<32x128xbf16>
    tpu.vector_store %arg4[%c0_7, %c0_8], %13 {strides = array<i32>} : memref<32x128xbf16, #tpu.memory_space<vmem>>, vector<32x128xbf16>,
    return
  }
  func.func @transform_0(%arg0: i32) -> (i32, i32) {
    %c0_i32 = arith.constant 0 : i32
    %c0_i32_0 = arith.constant 0 : i32
    return %arg0, %c0_i32 : i32, i32
  }
  func.func @transform_1(%arg0: i32) -> (i32, i32) {
    %c0_i32 = arith.constant 0 : i32
    %c0_i32_0 = arith.constant 0 : i32
    %c0_i32_1 = arith.constant 0 : i32
    return %c0_i32, %c0_i32_0 : i32, i32
  }
  func.func @transform_2(%arg0: i32) -> (i32, i32) {
    %c0_i32 = arith.constant 0 : i32
    %c0_i32_0 = arith.constant 0 : i32
    %c0_i32_1 = arith.constant 0 : i32
    return %c0_i32, %c0_i32_0 : i32, i32
  }
  func.func @transform_3(%arg0: i32) -> (i32, i32) {
    %c0_i32 = arith.constant 0 : i32
    %c0_i32_0 = arith.constant 0 : i32
    return %arg0, %c0_i32 : i32, i32
  }
}

module attributes {stable_mosaic.version = 11 : i64} {
  func.func @_mm_bias_silu_kernel(%arg0: i32, %arg1: memref<8x384xbf16, #tpu.memory_space<vmem>>, %arg2: memref<384x128xbf16, #tpu.memory_space<vmem>>, %arg3: memref<1x128xf32, #tpu.memory_space<vmem>>, %arg4: memref<8x128xbf16, #tpu.memory_space<vmem>>) attributes {dimension_semantics = [#tpu.dimension_semantics<parallel>], iteration_bounds = array<i64: 1>, scalar_prefetch = 0 : i64, scratch_operands = 0 : i64, tpu.core_type = #tpu.core_type<tc>, window_params = [{transform_indices = @transform_0, window_bounds = array<i64: 8, 384>}, {pipeline_mode = #tpu.pipeline_mode<synchronous>, transform_indices = @transform_1, window_bounds = array<i64: 384, 128>}, {pipeline_mode = #tpu.pipeline_mode<synchronous>, transform_indices = @transform_2, window_bounds = array<i64: 1, 128>}, {transform_indices = @transform_3, window_bounds = array<i64: 8, 128>}]} {
    %c0 = arith.constant 0 : index
    %c0_0 = arith.constant 0 : index
    %0 = vector.load %arg1[%c0, %c0_0] : memref<8x384xbf16, #tpu.memory_space<vmem>>, vector<8x384xbf16>
    %c0_1 = arith.constant 0 : index
    %c0_2 = arith.constant 0 : index
    %1 = vector.load %arg2[%c0_1, %c0_2] : memref<384x128xbf16, #tpu.memory_space<vmem>>, vector<384x128xbf16>
    %cst = arith.constant dense<0.000000e+00> : vector<8x128xf32>
    %2 = tpu.matmul %0, %1, %cst {dimension_numbers = #tpu.dot_dimension_numbers<[1], [0], [0], [1], [0, 0, 1, 1], [], []>} : vector<8x384xbf16>, vector<384x128xbf16>, vector<8x128xf32> -> vector<8x128xf32>
    %c0_3 = arith.constant 0 : index
    %c0_4 = arith.constant 0 : index
    %3 = vector.load %arg3[%c0_3, %c0_4] : memref<1x128xf32, #tpu.memory_space<vmem>>, vector<1x128xf32>
    %4 = vector.broadcast %3 : vector<1x128xf32> to vector<8x128xf32>
    %5 = arith.addf %2, %4 : vector<8x128xf32>
    %cst_5 = arith.constant 0.000000e+00 : f32
    %6 = vector.broadcast %cst_5 : f32 to vector<8x128xf32>
    %7 = arith.subf %6, %5 : vector<8x128xf32>
    %8 = math.exp %7 : vector<8x128xf32>
    %cst_6 = arith.constant 1.000000e+00 : f32
    %9 = vector.broadcast %cst_6 : f32 to vector<8x128xf32>
    %10 = arith.addf %9, %8 : vector<8x128xf32>
    %11 = tpu.reciprocal %10 {approx = true} : vector<8x128xf32> -> vector<8x128xf32>
    %12 = arith.mulf %5, %11 : vector<8x128xf32>
    %13 = arith.truncf %12 : vector<8x128xf32> to vector<8x128xbf16>
    %c0_7 = arith.constant 0 : index
    %c0_8 = arith.constant 0 : index
    %14 = vector.load %arg4[%c0_7, %c0_8] : memref<8x128xbf16, #tpu.memory_space<vmem>>, vector<8x128xbf16>
    tpu.vector_store %arg4[%c0_7, %c0_8], %13 {strides = array<i32>} : memref<8x128xbf16, #tpu.memory_space<vmem>>, vector<8x128xbf16>,
    return
  }
  func.func @transform_0(%arg0: i32) -> (i32, i32) {
    %c0_i32 = arith.constant 0 : i32
    %c0_i32_0 = arith.constant 0 : i32
    return %arg0, %c0_i32 : i32, i32
  }
  func.func @transform_1(%arg0: i32) -> (i32, i32) {
    %c0_i32 = arith.constant 0 : i32
    %c0_i32_0 = arith.constant 0 : i32
    %c0_i32_1 = arith.constant 0 : i32
    return %c0_i32, %c0_i32_0 : i32, i32
  }
  func.func @transform_2(%arg0: i32) -> (i32, i32) {
    %c0_i32 = arith.constant 0 : i32
    %c0_i32_0 = arith.constant 0 : i32
    %c0_i32_1 = arith.constant 0 : i32
    return %c0_i32, %c0_i32_0 : i32, i32
  }
  func.func @transform_3(%arg0: i32) -> (i32, i32) {
    %c0_i32 = arith.constant 0 : i32
    %c0_i32_0 = arith.constant 0 : i32
    return %arg0, %c0_i32 : i32, i32
  }
}

module attributes {stable_mosaic.version = 11 : i64} {
  func.func @_mm_bias_silu_kernel(%arg0: i32, %arg1: memref<8x512xbf16, #tpu.memory_space<vmem>>, %arg2: memref<512x128xbf16, #tpu.memory_space<vmem>>, %arg3: memref<1x128xf32, #tpu.memory_space<vmem>>, %arg4: memref<8x128xbf16, #tpu.memory_space<vmem>>) attributes {dimension_semantics = [#tpu.dimension_semantics<parallel>], iteration_bounds = array<i64: 1>, scalar_prefetch = 0 : i64, scratch_operands = 0 : i64, tpu.core_type = #tpu.core_type<tc>, window_params = [{transform_indices = @transform_0, window_bounds = array<i64: 8, 512>}, {pipeline_mode = #tpu.pipeline_mode<synchronous>, transform_indices = @transform_1, window_bounds = array<i64: 512, 128>}, {pipeline_mode = #tpu.pipeline_mode<synchronous>, transform_indices = @transform_2, window_bounds = array<i64: 1, 128>}, {transform_indices = @transform_3, window_bounds = array<i64: 8, 128>}]} {
    %c0 = arith.constant 0 : index
    %c0_0 = arith.constant 0 : index
    %0 = vector.load %arg1[%c0, %c0_0] : memref<8x512xbf16, #tpu.memory_space<vmem>>, vector<8x512xbf16>
    %c0_1 = arith.constant 0 : index
    %c0_2 = arith.constant 0 : index
    %1 = vector.load %arg2[%c0_1, %c0_2] : memref<512x128xbf16, #tpu.memory_space<vmem>>, vector<512x128xbf16>
    %cst = arith.constant dense<0.000000e+00> : vector<8x128xf32>
    %2 = tpu.matmul %0, %1, %cst {dimension_numbers = #tpu.dot_dimension_numbers<[1], [0], [0], [1], [0, 0, 1, 1], [], []>} : vector<8x512xbf16>, vector<512x128xbf16>, vector<8x128xf32> -> vector<8x128xf32>
    %c0_3 = arith.constant 0 : index
    %c0_4 = arith.constant 0 : index
    %3 = vector.load %arg3[%c0_3, %c0_4] : memref<1x128xf32, #tpu.memory_space<vmem>>, vector<1x128xf32>
    %4 = vector.broadcast %3 : vector<1x128xf32> to vector<8x128xf32>
    %5 = arith.addf %2, %4 : vector<8x128xf32>
    %cst_5 = arith.constant 0.000000e+00 : f32
    %6 = vector.broadcast %cst_5 : f32 to vector<8x128xf32>
    %7 = arith.subf %6, %5 : vector<8x128xf32>
    %8 = math.exp %7 : vector<8x128xf32>
    %cst_6 = arith.constant 1.000000e+00 : f32
    %9 = vector.broadcast %cst_6 : f32 to vector<8x128xf32>
    %10 = arith.addf %9, %8 : vector<8x128xf32>
    %11 = tpu.reciprocal %10 {approx = true} : vector<8x128xf32> -> vector<8x128xf32>
    %12 = arith.mulf %5, %11 : vector<8x128xf32>
    %13 = arith.truncf %12 : vector<8x128xf32> to vector<8x128xbf16>
    %c0_7 = arith.constant 0 : index
    %c0_8 = arith.constant 0 : index
    %14 = vector.load %arg4[%c0_7, %c0_8] : memref<8x128xbf16, #tpu.memory_space<vmem>>, vector<8x128xbf16>
    tpu.vector_store %arg4[%c0_7, %c0_8], %13 {strides = array<i32>} : memref<8x128xbf16, #tpu.memory_space<vmem>>, vector<8x128xbf16>,
    return
  }
  func.func @transform_0(%arg0: i32) -> (i32, i32) {
    %c0_i32 = arith.constant 0 : i32
    %c0_i32_0 = arith.constant 0 : i32
    return %arg0, %c0_i32 : i32, i32
  }
  func.func @transform_1(%arg0: i32) -> (i32, i32) {
    %c0_i32 = arith.constant 0 : i32
    %c0_i32_0 = arith.constant 0 : i32
    %c0_i32_1 = arith.constant 0 : i32
    return %c0_i32, %c0_i32_0 : i32, i32
  }
  func.func @transform_2(%arg0: i32) -> (i32, i32) {
    %c0_i32 = arith.constant 0 : i32
    %c0_i32_0 = arith.constant 0 : i32
    %c0_i32_1 = arith.constant 0 : i32
    return %c0_i32, %c0_i32_0 : i32, i32
  }
  func.func @transform_3(%arg0: i32) -> (i32, i32) {
    %c0_i32 = arith.constant 0 : i32
    %c0_i32_0 = arith.constant 0 : i32
    return %arg0, %c0_i32 : i32, i32
  }
}

</mosaic_0001>

<llo_original>
// kernel: unetpp_efficientnet_forward.5
$region0: #{unetpp_efficientnet_forward.5}
  #allocation0 [shape = 'u32[]', space=smem, size = 0x4, offset = 0x4, fixed_abs, tag = 'smem constant byte address 0x4 - core index']
  #allocation1 [shape = 'u32[144,128]{1,0:T(1,128)}', space=vmem, size = 0x12000, scoped, tag = 'internal scratch']
  %s0 = inlined_call_operand.vmem [shape: bf16[512,128], index: 0, kind: input, shape index: {}]
  %s1 = inlined_call_operand.vmem [shape: bf16[128,128], index: 1, kind: input, shape index: {}]
  %s2 = inlined_call_operand.vmem [shape: f32[1,128], index: 2, kind: input, shape index: {}]
  %s3 = inlined_call_operand.vmem [shape: bf16[512,128], index: 3, kind: output, shape index: {}]
  %s4 = sld [smem:[#allocation0]]
  $region22: #{unetpp_efficientnet_forward.5} parent=0
    _
  %s6 = ssub.s32 1, %s4
  %s7 = scalar_select 0, %s6, %s4
  // Predicated region
  $region2: #{unetpp_efficientnet_forward.5} parent=0 // pred_check
    _
  $region3: #{unetpp_efficientnet_forward.5} parent=0 // pred_check_branch
    %9 = sbr.rel (0) target = $region5
  $region4: #{unetpp_efficientnet_forward.5} parent=0 // pred_region
    _
  $region5: #{unetpp_efficientnet_forward.5} parent=0 // pred_fallthru
    _
  // Predicated region
  $region6: #{unetpp_efficientnet_forward.5} parent=0 // pred_check
    _
  $region7: #{unetpp_efficientnet_forward.5} parent=0 // pred_check_branch
    %11 = sbr.rel (0) target = $region9
  $region8: #{unetpp_efficientnet_forward.5} parent=0 // pred_region
    _
  $region9: #{unetpp_efficientnet_forward.5} parent=0 // pred_fallthru
    _
  // Predicated region
  $region10: #{unetpp_efficientnet_forward.5} parent=0 // pred_check
    _
  $region11: #{unetpp_efficientnet_forward.5} parent=0 // pred_check_branch
    %13 = sbr.rel (0) target = $region13
  $region12: #{unetpp_efficientnet_forward.5} parent=0 // pred_region
    _
  $region13: #{unetpp_efficientnet_forward.5} parent=0 // pred_fallthru
    _
  %v15 = vld [vmem:[%s0] sm:$0xf]
  %v16 = vld [vmem:[%s0 + $0x4] sm:$0xf]
  %v17 = vld [vmem:[%s0 + $0x8] sm:$0xf]
  %v18 = vld [vmem:[%s0 + $0xc] sm:$0xf]
  %v19 = vld [vmem:[%s0 + $0x10] sm:$0xf]
  %v20 = vld [vmem:[%s0 + $0x14] sm:$0xf]
  %v21 = vld [vmem:[%s0 + $0x18] sm:$0xf]
  %v22 = vld [vmem:[%s0 + $0x1c] sm:$0xf]
  %v23 = vld [vmem:[%s0 + $0x20] sm:$0xf]
  %v24 = vld [vmem:[%s0 + $0x24] sm:$0xf]
  %v25 = vld [vmem:[%s0 + $0x28] sm:$0xf]
  %v26 = vld [vmem:[%s0 + $0x2c] sm:$0xf]
  %v27 = vld [vmem:[%s0 + $0x30] sm:$0xf]
  %v28 = vld [vmem:[%s0 + $0x34] sm:$0xf]
  %v29 = vld [vmem:[%s0 + $0x38] sm:$0xf]
  %v30 = vld [vmem:[%s0 + $0x3c] sm:$0xf]
  %v31 = vld [vmem:[%s0 + $0x40] sm:$0xf]
  %v32 = vld [vmem:[%s0 + $0x44] sm:$0xf]
  %v33 = vld [vmem:[%s0 + $0x48] sm:$0xf]
  %v34 = vld [vmem:[%s0 + $0x4c] sm:$0xf]
  %v35 = vld [vmem:[%s0 + $0x50] sm:$0xf]
  %v36 = vld [vmem:[%s0 + $0x54] sm:$0xf]
  %v37 = vld [vmem:[%s0 + $0x58] sm:$0xf]
  %v38 = vld [vmem:[%s0 + $0x5c] sm:$0xf]
  %v39 = vld [vmem:[%s0 + $0x60] sm:$0xf]
  %v40 = vld [vmem:[%s0 + $0x64] sm:$0xf]
  %v41 = vld [vmem:[%s0 + $0x68] sm:$0xf]
  %v42 = vld [vmem:[%s0 + $0x6c] sm:$0xf]
  %v43 = vld [vmem:[%s0 + $0x70] sm:$0xf]
  %v44 = vld [vmem:[%s0 + $0x74] sm:$0xf]
  %v45 = vld [vmem:[%s0 + $0x78] sm:$0xf]
  %v46 = vld [vmem:[%s0 + $0x7c] sm:$0xf]
  %v47 = vld [vmem:[%s0 + $0x80] sm:$0xf]
  %v48 = vld [vmem:[%s0 + $0x84] sm:$0xf]
  %v49 = vld [vmem:[%s0 + $0x88] sm:$0xf]
  %v50 = vld [vmem:[%s0 + $0x8c] sm:$0xf]
  %v51 = vld [vmem:[%s0 + $0x90] sm:$0xf]
  %v52 = vld [vmem:[%s0 + $0x94] sm:$0xf]
  %v53 = vld [vmem:[%s0 + $0x98] sm:$0xf]
  %v54 = vld [vmem:[%s0 + $0x9c] sm:$0xf]
  %v55 = vld [vmem:[%s0 + $0xa0] sm:$0xf]
  %v56 = vld [vmem:[%s0 + $0xa4] sm:$0xf]
  %v57 = vld [vmem:[%s0 + $0xa8] sm:$0xf]
  %v58 = vld [vmem:[%s0 + $0xac] sm:$0xf]
  %v59 = vld [vmem:[%s0 + $0xb0] sm:$0xf]
  %v60 = vld [vmem:[%s0 + $0xb4] sm:$0xf]
  %v61 = vld [vmem:[%s0 + $0xb8] sm:$0xf]
  %v62 = vld [vmem:[%s0 + $0xbc] sm:$0xf]
  %v63 = vld [vmem:[%s0 + $0xc0] sm:$0xf]
  %v64 = vld [vmem:[%s0 + $0xc4] sm:$0xf]
  %v65 = vld [vmem:[%s0 + $0xc8] sm:$0xf]
  %v66 = vld [vmem:[%s0 + $0xcc] sm:$0xf]
  %v67 = vld [vmem:[%s0 + $0xd0] sm:$0xf]
  %v68 = vld [vmem:[%s0 + $0xd4] sm:$0xf]
  %v69 = vld [vmem:[%s0 + $0xd8] sm:$0xf]
  %v70 = vld [vmem:[%s0 + $0xdc] sm:$0xf]
  %v71 = vld [vmem:[%s0 + $0xe0] sm:$0xf]
  %v72 = vld [vmem:[%s0 + $0xe4] sm:$0xf]
  %v73 = vld [vmem:[%s0 + $0xe8] sm:$0xf]
  %v74 = vld [vmem:[%s0 + $0xec] sm:$0xf]
  %v75 = vld [vmem:[%s0 + $0xf0] sm:$0xf]
  %v76 = vld [vmem:[%s0 + $0xf4] sm:$0xf]
  %v77 = vld [vmem:[%s0 + $0xf8] sm:$0xf]
  %v78 = vld [vmem:[%s0 + $0xfc] sm:$0xf]
  %v79 = vld [vmem:[%s1] sm:$0xf]
  %v80 = vld [vmem:[%s1 + $0x4] sm:$0xf]
  %v81 = vld [vmem:[%s1 + $0x8] sm:$0xf]
  %v82 = vld [vmem:[%s1 + $0xc] sm:$0xf]
  %v83 = vld [vmem:[%s1 + $0x10] sm:$0xf]
  %v84 = vld [vmem:[%s1 + $0x14] sm:$0xf]
  %v85 = vld [vmem:[%s1 + $0x18] sm:$0xf]
  %v86 = vld [vmem:[%s1 + $0x1c] sm:$0xf]
  %v87 = vld [vmem:[%s1 + $0x20] sm:$0xf]
  %v88 = vld [vmem:[%s1 + $0x24] sm:$0xf]
  %v89 = vld [vmem:[%s1 + $0x28] sm:$0xf]
  %v90 = vld [vmem:[%s1 + $0x2c] sm:$0xf]
  %v91 = vld [vmem:[%s1 + $0x30] sm:$0xf]
  %v92 = vld [vmem:[%s1 + $0x34] sm:$0xf]
  %v93 = vld [vmem:[%s1 + $0x38] sm:$0xf]
  %v94 = vld [vmem:[%s1 + $0x3c] sm:$0xf]
  %v95 = vld [vmem:[%s2] sm:$0x1]
  %v97 = vlaneseq
  %v98 = vshrl.u32 %v97, 7
  %v99 = vsub.s32 0, %v98
  %v100 = vrot.slane %v95, %v99
  %v166 = vunpack.c.l.b16 %v15
  %v167 = vunpack.c.l.b16 %v16
  %v168 = vunpack.c.l.b16 %v17
  %v169 = vunpack.c.l.b16 %v18
  %v170 = vunpack.c.l.b16 %v19
  %v171 = vunpack.c.l.b16 %v20
  %v172 = vunpack.c.l.b16 %v21
  %v173 = vunpack.c.l.b16 %v22
  %v174 = vunpack.c.l.b16 %v23
  %v175 = vunpack.c.l.b16 %v24
  %v176 = vunpack.c.l.b16 %v25
  %v177 = vunpack.c.l.b16 %v26
  %v178 = vunpack.c.l.b16 %v27
  %v179 = vunpack.c.l.b16 %v28
  %v180 = vunpack.c.l.b16 %v29
  %v181 = vunpack.c.l.b16 %v30
  %v182 = vunpack.c.l.b16 %v31
  %v183 = vunpack.c.l.b16 %v32
  %v184 = vunpack.c.l.b16 %v33
  %v185 = vunpack.c.l.b16 %v34
  %v186 = vunpack.c.l.b16 %v35
  %v187 = vunpack.c.l.b16 %v36
  %v188 = vunpack.c.l.b16 %v37
  %v189 = vunpack.c.l.b16 %v38
  %v190 = vunpack.c.l.b16 %v39
  %v191 = vunpack.c.l.b16 %v40
  %v192 = vunpack.c.l.b16 %v41
  %v193 = vunpack.c.l.b16 %v42
  %v194 = vunpack.c.l.b16 %v43
  %v195 = vunpack.c.l.b16 %v44
  %v196 = vunpack.c.l.b16 %v45
  %v197 = vunpack.c.l.b16 %v46
  %v198 = vunpack.c.l.b16 %v47
  %v199 = vunpack.c.l.b16 %v48
  %v200 = vunpack.c.l.b16 %v49
  %v201 = vunpack.c.l.b16 %v50
  %v202 = vunpack.c.l.b16 %v51
  %v203 = vunpack.c.l.b16 %v52
  %v204 = vunpack.c.l.b16 %v53
  %v205 = vunpack.c.l.b16 %v54
  %v206 = vunpack.c.l.b16 %v55
  %v207 = vunpack.c.l.b16 %v56
  %v208 = vunpack.c.l.b16 %v57
  %v209 = vunpack.c.l.b16 %v58
  %v210 = vunpack.c.l.b16 %v59
  %v211 = vunpack.c.l.b16 %v60
  %v212 = vunpack.c.l.b16 %v61
  %v213 = vunpack.c.l.b16 %v62
  %v214 = vunpack.c.l.b16 %v63
  %v215 = vunpack.c.l.b16 %v64
  %v216 = vunpack.c.l.b16 %v65
  %v217 = vunpack.c.l.b16 %v66
  %v218 = vunpack.c.l.b16 %v67
  %v219 = vunpack.c.l.b16 %v68
  %v220 = vunpack.c.l.b16 %v69
  %v221 = vunpack.c.l.b16 %v70
  %v222 = vunpack.c.l.b16 %v71
  %v223 = vunpack.c.l.b16 %v72
  %v224 = vunpack.c.l.b16 %v73
  %v225 = vunpack.c.l.b16 %v74
  %v226 = vunpack.c.l.b16 %v75
  %v227 = vunpack.c.l.b16 %v76
  %v228 = vunpack.c.l.b16 %v77
  %v229 = vunpack.c.l.b16 %v78
  %v230 = vpack.c.b16 %v167, %v166
  %v231 = vpack.c.b16 %v169, %v168
  %v232 = vpack.c.b16 %v171, %v170
  %v233 = vpack.c.b16 %v173, %v172
  %v234 = vpack.c.b16 %v175, %v174
  %v235 = vpack.c.b16 %v177, %v176
  %v236 = vpack.c.b16 %v179, %v178
  %v237 = vpack.c.b16 %v181, %v180
  %v238 = vpack.c.b16 %v183, %v182
  %v239 = vpack.c.b16 %v185, %v184
  %v240 = vpack.c.b16 %v187, %v186
  %v241 = vpack.c.b16 %v189, %v188
  %v242 = vpack.c.b16 %v191, %v190
  %v243 = vpack.c.b16 %v193, %v192
  %v244 = vpack.c.b16 %v195, %v194
  %v245 = vpack.c.b16 %v197, %v196
  %v246 = vpack.c.b16 %v199, %v198
  %v247 = vpack.c.b16 %v201, %v200
  %v248 = vpack.c.b16 %v203, %v202
  %v249 = vpack.c.b16 %v205, %v204
  %v250 = vpack.c.b16 %v207, %v206
  %v251 = vpack.c.b16 %v209, %v208
  %v252 = vpack.c.b16 %v211, %v210
  %v253 = vpack.c.b16 %v213, %v212
  %v254 = vpack.c.b16 %v215, %v214
  %v255 = vpack.c.b16 %v217, %v216
  %v256 = vpack.c.b16 %v219, %v218
  %v257 = vpack.c.b16 %v221, %v220
  %v258 = vpack.c.b16 %v223, %v222
  %v259 = vpack.c.b16 %v225, %v224
  %v260 = vpack.c.b16 %v227, %v226
  %v261 = vpack.c.b16 %v229, %v228
  %v310 = vunpack.c.l.b16 %v79
  %v311 = vunpack.c.l.b16 %v80
  %v312 = vunpack.c.l.b16 %v81
  %v313 = vunpack.c.l.b16 %v82
  %v314 = vunpack.c.l.b16 %v83
  %v315 = vunpack.c.l.b16 %v84
  %v316 = vunpack.c.l.b16 %v85
  %v317 = vunpack.c.l.b16 %v86
  %v318 = vunpack.c.l.b16 %v87
  %v319 = vunpack.c.l.b16 %v88
  %v320 = vunpack.c.l.b16 %v89
  %v321 = vunpack.c.l.b16 %v90
  %v322 = vunpack.c.l.b16 %v91
  %v323 = vunpack.c.l.b16 %v92
  %v324 = vunpack.c.l.b16 %v93
  %v325 = vunpack.c.l.b16 %v94
  %v326 = vpack.c.b16 %v311, %v310
  %v327 = vpack.c.b16 %v313, %v312
  %v328 = vpack.c.b16 %v315, %v314
  %v329 = vpack.c.b16 %v317, %v316
  %v330 = vpack.c.b16 %v319, %v318
  %v331 = vpack.c.b16 %v321, %v320
  %v332 = vpack.c.b16 %v323, %v322
  %v333 = vpack.c.b16 %v325, %v324
  %342 = vmatprep.subr.bf16.mxu0 0
  %343 = vmatpush1.bf16.msra.mxu0 %v333
  %344 = vmatprep.subr.bf16.mxu0 0
  %345 = vmatpush1.bf16.msra.mxu0 %v332
  %346 = vmatprep.subr.bf16.mxu0 0
  %347 = vmatpush1.bf16.msra.mxu0 %v331
  %348 = vmatprep.subr.bf16.mxu0 0
  %349 = vmatpush1.bf16.msra.mxu0 %v330
  %350 = vmatprep.subr.bf16.mxu0 0
  %351 = vmatpush1.bf16.msra.mxu0 %v329
  %352 = vmatprep.subr.bf16.mxu0 0
  %353 = vmatpush1.bf16.msra.mxu0 %v328
  %354 = vmatprep.subr.bf16.mxu0 0
  %355 = vmatpush1.bf16.msra.mxu0 %v327
  %356 = vmatprep.subr.bf16.mxu0 0
  %357 = vmatpush1.bf16.msra.mxu0 %v326
  %358 = vmatprep.subr.bf16.mxu0 0
  %359 = vmatpush2.bf16.msra.mxu0 0
  %360 = vmatprep.subr.bf16.mxu0 0
  %361 = vmatpush2.bf16.msra.mxu0 0
  %362 = vmatprep.subr.bf16.mxu0 0
  %363 = vmatpush2.bf16.msra.mxu0 0
  %364 = vmatprep.subr.bf16.mxu0 0
  %365 = vmatpush2.bf16.msra.mxu0 0
  %366 = vmatprep.subr.bf16.mxu0 0
  %367 = vmatpush2.bf16.msra.mxu0 0
  %368 = vmatprep.subr.bf16.mxu0 0
  %369 = vmatpush2.bf16.msra.mxu0 0
  %370 = vmatprep.subr.bf16.mxu0 0
  %371 = vmatpush2.bf16.msra.mxu0 0
  %372 = vmatprep.subr.bf16.mxu0 0
  %373 = vmatpush2.bf16.msra.mxu0 0
  %374 = vmatprep.mubr.bf16.mxu0 0
  %375 = vmatmul.mubr.bf16.gmra.mxu0 %v230
  %v376 = vpop.f32.mrf.mxu0
  %v377 = vadd.f32 %v100, %v376
  %v378 = vpop.f32.mrf.mxu0
  %v379 = vpop.f32.mrf.mxu0
  %v380 = vadd.f32 %v100, %v379
  %v381 = vpop.f32.mrf.mxu0
  %382 = vmatprep.mubr.bf16.mxu0 0
  %383 = vmatmul.mubr.bf16.gmra.mxu0 %v231
  %v384 = vpop.f32.mrf.mxu0
  %v385 = vadd.f32 %v100, %v384
  %v386 = vpop.f32.mrf.mxu0
  %v387 = vpop.f32.mrf.mxu0
  %v388 = vadd.f32 %v100, %v387
  %v389 = vpop.f32.mrf.mxu0
  %390 = vmatprep.mubr.bf16.mxu0 0
  %391 = vmatmul.mubr.bf16.gmra.mxu0 %v232
  %v392 = vpop.f32.mrf.mxu0
  %v393 = vadd.f32 %v100, %v392
  %v394 = vpop.f32.mrf.mxu0
  %v395 = vpop.f32.mrf.mxu0
  %v396 = vadd.f32 %v100, %v395
  %v397 = vpop.f32.mrf.mxu0
  %398 = vmatprep.mubr.bf16.mxu0 0
  %399 = vmatmul.mubr.bf16.gmra.mxu0 %v233
  %v400 = vpop.f32.mrf.mxu0
  %v401 = vadd.f32 %v100, %v400
  %v402 = vpop.f32.mrf.mxu0
  %v403 = vpop.f32.mrf.mxu0
  %v404 = vadd.f32 %v100, %v403
  %v405 = vpop.f32.mrf.mxu0
  %406 = vmatprep.mubr.bf16.mxu0 0
  %407 = vmatmul.mubr.bf16.gmra.mxu0 %v234
  %v408 = vpop.f32.mrf.mxu0
  %v409 = vadd.f32 %v100, %v408
  %v410 = vpop.f32.mrf.mxu0
  %v411 = vpop.f32.mrf.mxu0
  %v412 = vadd.f32 %v100, %v411
  %v413 = vpop.f32.mrf.mxu0
  %414 = vmatprep.mubr.bf16.mxu0 0
  %415 = vmatmul.mubr.bf16.gmra.mxu0 %v235
  %v416 = vpop.f32.mrf.mxu0
  %v417 = vadd.f32 %v100, %v416
  %v418 = vpop.f32.mrf.mxu0
  %v419 = vpop.f32.mrf.mxu0
  %v420 = vadd.f32 %v100, %v419
  %v421 = vpop.f32.mrf.mxu0
  %422 = vmatprep.mubr.bf16.mxu0 0
  %423 = vmatmul.mubr.bf16.gmra.mxu0 %v236
  %v424 = vpop.f32.mrf.mxu0
  %v425 = vadd.f32 %v100, %v424
  %v426 = vpop.f32.mrf.mxu0
  %v427 = vpop.f32.mrf.mxu0
  %v428 = vadd.f32 %v100, %v427
  %v429 = vpop.f32.mrf.mxu0
  %430 = vmatprep.mubr.bf16.mxu0 0
  %431 = vmatmul.mubr.bf16.gmra.mxu0 %v237
  %v432 = vpop.f32.mrf.mxu0
  %v433 = vadd.f32 %v100, %v432
  %v434 = vpop.f32.mrf.mxu0
  %v435 = vpop.f32.mrf.mxu0
  %v436 = vadd.f32 %v100, %v435
  %v437 = vpop.f32.mrf.mxu0
  %438 = vmatprep.mubr.bf16.mxu0 0
  %439 = vmatmul.mubr.bf16.gmra.mxu0 %v238
  %v440 = vpop.f32.mrf.mxu0
  %v441 = vadd.f32 %v100, %v440
  %v442 = vpop.f32.mrf.mxu0
  %v443 = vpop.f32.mrf.mxu0
  %v444 = vadd.f32 %v100, %v443
  %v445 = vpop.f32.mrf.mxu0
  %446 = vmatprep.mubr.bf16.mxu0 0
  %447 = vmatmul.mubr.bf16.gmra.mxu0 %v239
  %v448 = vpop.f32.mrf.mxu0
  %v449 = vadd.f32 %v100, %v448
  %v450 = vpop.f32.mrf.mxu0
  %v451 = vpop.f32.mrf.mxu0
  %v452 = vadd.f32 %v100, %v451
  %v453 = vpop.f32.mrf.mxu0
  %454 = vmatprep.mubr.bf16.mxu0 0
  %455 = vmatmul.mubr.bf16.gmra.mxu0 %v240
  %v456 = vpop.f32.mrf.mxu0
  %v457 = vadd.f32 %v100, %v456
  %v458 = vpop.f32.mrf.mxu0
  %v459 = vpop.f32.mrf.mxu0
  %v460 = vadd.f32 %v100, %v459
  %v461 = vpop.f32.mrf.mxu0
  %462 = vmatprep.mubr.bf16.mxu0 0
  %463 = vmatmul.mubr.bf16.gmra.mxu0 %v241
  %v464 = vpop.f32.mrf.mxu0
  %v465 = vadd.f32 %v100, %v464
  %v466 = vpop.f32.mrf.mxu0
  %v467 = vpop.f32.mrf.mxu0
  %v468 = vadd.f32 %v100, %v467
  %v469 = vpop.f32.mrf.mxu0
  %470 = vmatprep.mubr.bf16.mxu0 0
  %471 = vmatmul.mubr.bf16.gmra.mxu0 %v242
  %v472 = vpop.f32.mrf.mxu0
  %v473 = vadd.f32 %v100, %v472
  %v474 = vpop.f32.mrf.mxu0
  %v475 = vpop.f32.mrf.mxu0
  %v476 = vadd.f32 %v100, %v475
  %v477 = vpop.f32.mrf.mxu0
  %478 = vmatprep.mubr.bf16.mxu0 0
  %479 = vmatmul.mubr.bf16.gmra.mxu0 %v243
  %v480 = vpop.f32.mrf.mxu0
  %v481 = vadd.f32 %v100, %v480
  %v482 = vpop.f32.mrf.mxu0
  %v483 = vpop.f32.mrf.mxu0
  %v484 = vadd.f32 %v100, %v483
  %v485 = vpop.f32.mrf.mxu0
  %486 = vmatprep.mubr.bf16.mxu0 0
  %487 = vmatmul.mubr.bf16.gmra.mxu0 %v244
  %v488 = vpop.f32.mrf.mxu0
  %v489 = vadd.f32 %v100, %v488
  %v490 = vpop.f32.mrf.mxu0
  %v491 = vpop.f32.mrf.mxu0
  %v492 = vadd.f32 %v100, %v491
  %v493 = vpop.f32.mrf.mxu0
  %494 = vmatprep.mubr.bf16.mxu0 0
  %495 = vmatmul.mubr.bf16.gmra.mxu0 %v245
  %v496 = vpop.f32.mrf.mxu0
  %v497 = vadd.f32 %v100, %v496
  %v498 = vpop.f32.mrf.mxu0
  %v499 = vpop.f32.mrf.mxu0
  %v500 = vadd.f32 %v100, %v499
  %v501 = vpop.f32.mrf.mxu0
  %502 = vmatprep.mubr.bf16.mxu0 0
  %503 = vmatmul.mubr.bf16.gmra.mxu0 %v246
  %v504 = vpop.f32.mrf.mxu0
  %v505 = vadd.f32 %v100, %v504
  %v506 = vpop.f32.mrf.mxu0
  %v507 = vpop.f32.mrf.mxu0
  %v508 = vadd.f32 %v100, %v507
  %v509 = vpop.f32.mrf.mxu0
  %510 = vmatprep.mubr.bf16.mxu0 0
  %511 = vmatmul.mubr.bf16.gmra.mxu0 %v247
  %v512 = vpop.f32.mrf.mxu0
  %v513 = vadd.f32 %v100, %v512
  %v514 = vpop.f32.mrf.mxu0
  %v515 = vpop.f32.mrf.mxu0
  %v516 = vadd.f32 %v100, %v515
  %v517 = vpop.f32.mrf.mxu0
  %518 = vmatprep.mubr.bf16.mxu0 0
  %519 = vmatmul.mubr.bf16.gmra.mxu0 %v248
  %v520 = vpop.f32.mrf.mxu0
  %v521 = vadd.f32 %v100, %v520
  %v522 = vpop.f32.mrf.mxu0
  %v523 = vpop.f32.mrf.mxu0
  %v524 = vadd.f32 %v100, %v523
  %v525 = vpop.f32.mrf.mxu0
  %526 = vmatprep.mubr.bf16.mxu0 0
  %527 = vmatmul.mubr.bf16.gmra.mxu0 %v249
  %v528 = vpop.f32.mrf.mxu0
  %v529 = vadd.f32 %v100, %v528
  %v530 = vpop.f32.mrf.mxu0
  %v531 = vpop.f32.mrf.mxu0
  %v532 = vadd.f32 %v100, %v531
  %v533 = vpop.f32.mrf.mxu0
  %534 = vmatprep.mubr.bf16.mxu0 0
  %535 = vmatmul.mubr.bf16.gmra.mxu0 %v250
  %v536 = vpop.f32.mrf.mxu0
  %v537 = vadd.f32 %v100, %v536
  %v538 = vpop.f32.mrf.mxu0
  %v539 = vpop.f32.mrf.mxu0
  %v540 = vadd.f32 %v100, %v539
  %v541 = vpop.f32.mrf.mxu0
  %542 = vmatprep.mubr.bf16.mxu0 0
  %543 = vmatmul.mubr.bf16.gmra.mxu0 %v251
  %v544 = vpop.f32.mrf.mxu0
  %v545 = vadd.f32 %v100, %v544
  %v546 = vpop.f32.mrf.mxu0
  %v547 = vpop.f32.mrf.mxu0
  %v548 = vadd.f32 %v100, %v547
  %v549 = vpop.f32.mrf.mxu0
  %550 = vmatprep.mubr.bf16.mxu0 0
  %551 = vmatmul.mubr.bf16.gmra.mxu0 %v252
  %v552 = vpop.f32.mrf.mxu0
  %v553 = vadd.f32 %v100, %v552
  %v554 = vpop.f32.mrf.mxu0
  %v555 = vpop.f32.mrf.mxu0
  %v556 = vadd.f32 %v100, %v555
  %v557 = vpop.f32.mrf.mxu0
  %558 = vmatprep.mubr.bf16.mxu0 0
  %559 = vmatmul.mubr.bf16.gmra.mxu0 %v253
  %v560 = vpop.f32.mrf.mxu0
  %v561 = vadd.f32 %v100, %v560
  %v562 = vpop.f32.mrf.mxu0
  %v563 = vpop.f32.mrf.mxu0
  %v564 = vadd.f32 %v100, %v563
  %v565 = vpop.f32.mrf.mxu0
  %566 = vmatprep.mubr.bf16.mxu0 0
  %567 = vmatmul.mubr.bf16.gmra.mxu0 %v254
  %v568 = vpop.f32.mrf.mxu0
  %v569 = vadd.f32 %v100, %v568
  %v570 = vpop.f32.mrf.mxu0
  %v571 = vpop.f32.mrf.mxu0
  %v572 = vadd.f32 %v100, %v571
  %v573 = vpop.f32.mrf.mxu0
  %574 = vmatprep.mubr.bf16.mxu0 0
  %575 = vmatmul.mubr.bf16.gmra.mxu0 %v255
  %v576 = vpop.f32.mrf.mxu0
  %v577 = vadd.f32 %v100, %v576
  %v578 = vpop.f32.mrf.mxu0
  %v579 = vpop.f32.mrf.mxu0
  %v580 = vadd.f32 %v100, %v579
  %v581 = vpop.f32.mrf.mxu0
  %582 = vmatprep.mubr.bf16.mxu0 0
  %583 = vmatmul.mubr.bf16.gmra.mxu0 %v256
  %v584 = vpop.f32.mrf.mxu0
  %v585 = vadd.f32 %v100, %v584
  %v586 = vpop.f32.mrf.mxu0
  %v587 = vpop.f32.mrf.mxu0
  %v588 = vadd.f32 %v100, %v587
  %v589 = vpop.f32.mrf.mxu0
  %590 = vmatprep.mubr.bf16.mxu0 0
  %591 = vmatmul.mubr.bf16.gmra.mxu0 %v257
  %v592 = vpop.f32.mrf.mxu0
  %v593 = vadd.f32 %v100, %v592
  %v594 = vpop.f32.mrf.mxu0
  %v595 = vpop.f32.mrf.mxu0
  %v596 = vadd.f32 %v100, %v595
  %v597 = vpop.f32.mrf.mxu0
  %598 = vmatprep.mubr.bf16.mxu0 0
  %599 = vmatmul.mubr.bf16.gmra.mxu0 %v258
  %v600 = vpop.f32.mrf.mxu0
  %v601 = vadd.f32 %v100, %v600
  %v602 = vpop.f32.mrf.mxu0
  %v603 = vpop.f32.mrf.mxu0
  %v604 = vadd.f32 %v100, %v603
  %v605 = vpop.f32.mrf.mxu0
  %606 = vmatprep.mubr.bf16.mxu0 0
  %607 = vmatmul.mubr.bf16.gmra.mxu0 %v259
  %v608 = vpop.f32.mrf.mxu0
  %v609 = vadd.f32 %v100, %v608
  %v610 = vpop.f32.mrf.mxu0
  %v611 = vpop.f32.mrf.mxu0
  %v612 = vadd.f32 %v100, %v611
  %v613 = vpop.f32.mrf.mxu0
  %614 = vmatprep.mubr.bf16.mxu0 0
  %615 = vmatmul.mubr.bf16.gmra.mxu0 %v260
  %v616 = vpop.f32.mrf.mxu0
  %v617 = vadd.f32 %v100, %v616
  %v618 = vpop.f32.mrf.mxu0
  %v619 = vpop.f32.mrf.mxu0
  %v620 = vadd.f32 %v100, %v619
  %v621 = vpop.f32.mrf.mxu0
  %622 = vmatprep.mubr.bf16.mxu0 0
  %623 = vmatmul.mubr.bf16.gmra.mxu0 %v261
  %v624 = vpop.f32.mrf.mxu0
  %v625 = vadd.f32 %v100, %v624
  %v626 = vpop.f32.mrf.mxu0
  %v627 = vpop.f32.mrf.mxu0
  %v628 = vadd.f32 %v100, %v627
  %v629 = vpop.f32.mrf.mxu0
  %630 = vdwg.mxu0
  %v631 = vsub.f32 0.0, %v377
  %v632 = vsub.f32 0.0, %v380
  %v633 = vsub.f32 0.0, %v385
  %v634 = vsub.f32 0.0, %v388
  %v635 = vsub.f32 0.0, %v393
  %v636 = vsub.f32 0.0, %v396
  %v637 = vsub.f32 0.0, %v401
  %v638 = vsub.f32 0.0, %v404
  %v639 = vsub.f32 0.0, %v409
  %v640 = vsub.f32 0.0, %v412
  %v641 = vsub.f32 0.0, %v417
  %v642 = vsub.f32 0.0, %v420
  %v643 = vsub.f32 0.0, %v425
  %v644 = vsub.f32 0.0, %v428
  %v645 = vsub.f32 0.0, %v433
  %v646 = vsub.f32 0.0, %v436
  %v647 = vsub.f32 0.0, %v441
  %v648 = vsub.f32 0.0, %v444
  %v649 = vsub.f32 0.0, %v449
  %v650 = vsub.f32 0.0, %v452
  %v651 = vsub.f32 0.0, %v457
  %v652 = vsub.f32 0.0, %v460
  %v653 = vsub.f32 0.0, %v465
  %v654 = vsub.f32 0.0, %v468
  %v655 = vsub.f32 0.0, %v473
  %v656 = vsub.f32 0.0, %v476
  %v657 = vsub.f32 0.0, %v481
  %v658 = vsub.f32 0.0, %v484
  %v659 = vsub.f32 0.0, %v489
  %v660 = vsub.f32 0.0, %v492
  %v661 = vsub.f32 0.0, %v497
  %v662 = vsub.f32 0.0, %v500
  %v663 = vsub.f32 0.0, %v505
  %v664 = vsub.f32 0.0, %v508
  %v665 = vsub.f32 0.0, %v513
  %v666 = vsub.f32 0.0, %v516
  %v667 = vsub.f32 0.0, %v521
  %v668 = vsub.f32 0.0, %v524
  %v669 = vsub.f32 0.0, %v529
  %v670 = vsub.f32 0.0, %v532
  %v671 = vsub.f32 0.0, %v537
  %v672 = vsub.f32 0.0, %v540
  %v673 = vsub.f32 0.0, %v545
  %v674 = vsub.f32 0.0, %v548
  %v675 = vsub.f32 0.0, %v553
  %v676 = vsub.f32 0.0, %v556
  %v677 = vsub.f32 0.0, %v561
  %v678 = vsub.f32 0.0, %v564
  %v679 = vsub.f32 0.0, %v569
  %v680 = vsub.f32 0.0, %v572
  %v681 = vsub.f32 0.0, %v577
  %v682 = vsub.f32 0.0, %v580
  %v683 = vsub.f32 0.0, %v585
  %v684 = vsub.f32 0.0, %v588
  %v685 = vsub.f32 0.0, %v593
  %v686 = vsub.f32 0.0, %v596
  %v687 = vsub.f32 0.0, %v601
  %v688 = vsub.f32 0.0, %v604
  %v689 = vsub.f32 0.0, %v609
  %v690 = vsub.f32 0.0, %v612
  %v691 = vsub.f32 0.0, %v617
  %v692 = vsub.f32 0.0, %v620
  %v693 = vsub.f32 0.0, %v625
  %v694 = vsub.f32 0.0, %v628
  %v695 = vmul.f32 %v631, 1.442695
  %v696 = vpow.pop %v695
  %v697 = vmul.f32 %v632, 1.442695
  %v698 = vpow.pop %v697
  %v699 = vmul.f32 %v633, 1.442695
  %v700 = vpow.pop %v699
  %v701 = vmul.f32 %v634, 1.442695
  %v702 = vpow.pop %v701
  %v703 = vmul.f32 %v635, 1.442695
  %v704 = vpow.pop %v703
  %v705 = vmul.f32 %v636, 1.442695
  %v706 = vpow.pop %v705
  %v707 = vmul.f32 %v637, 1.442695
  %v708 = vpow.pop %v707
  %v709 = vmul.f32 %v638, 1.442695
  %v710 = vpow.pop %v709
  %v711 = vmul.f32 %v639, 1.442695
  %v712 = vpow.pop %v711
  %v713 = vmul.f32 %v640, 1.442695
  %v714 = vpow.pop %v713
  %v715 = vmul.f32 %v641, 1.442695
  %v716 = vpow.pop %v715
  %v717 = vmul.f32 %v642, 1.442695
  %v718 = vpow.pop %v717
  %v719 = vmul.f32 %v643, 1.442695
  %v720 = vpow.pop %v719
  %v721 = vmul.f32 %v644, 1.442695
  %v722 = vpow.pop %v721
  %v723 = vmul.f32 %v645, 1.442695
  %v724 = vpow.pop %v723
  %v725 = vmul.f32 %v646, 1.442695
  %v726 = vpow.pop %v725
  %v727 = vmul.f32 %v647, 1.442695
  %v728 = vpow.pop %v727
  %v729 = vmul.f32 %v648, 1.442695
  %v730 = vpow.pop %v729
  %v731 = vmul.f32 %v649, 1.442695
  %v732 = vpow.pop %v731
  %v733 = vmul.f32 %v650, 1.442695
  %v734 = vpow.pop %v733
  %v735 = vmul.f32 %v651, 1.442695
  %v736 = vpow.pop %v735
  %v737 = vmul.f32 %v652, 1.442695
  %v738 = vpow.pop %v737
  %v739 = vmul.f32 %v653, 1.442695
  %v740 = vpow.pop %v739
  %v741 = vmul.f32 %v654, 1.442695
  %v742 = vpow.pop %v741
  %v743 = vmul.f32 %v655, 1.442695
  %v744 = vpow.pop %v743
  %v745 = vmul.f32 %v656, 1.442695
  %v746 = vpow.pop %v745
  %v747 = vmul.f32 %v657, 1.442695
  %v748 = vpow.pop %v747
  %v749 = vmul.f32 %v658, 1.442695
  %v750 = vpow.pop %v749
  %v751 = vmul.f32 %v659, 1.442695
  %v752 = vpow.pop %v751
  %v753 = vmul.f32 %v660, 1.442695
  %v754 = vpow.pop %v753
  %v755 = vmul.f32 %v661, 1.442695
  %v756 = vpow.pop %v755
  %v757 = vmul.f32 %v662, 1.442695
  %v758 = vpow.pop %v757
  %v759 = vmul.f32 %v663, 1.442695
  %v760 = vpow.pop %v759
  %v761 = vmul.f32 %v664, 1.442695
  %v762 = vpow.pop %v761
  %v763 = vmul.f32 %v665, 1.442695
  %v764 = vpow.pop %v763
  %v765 = vmul.f32 %v666, 1.442695
  %v766 = vpow.pop %v765
  %v767 = vmul.f32 %v667, 1.442695
  %v768 = vpow.pop %v767
  %v769 = vmul.f32 %v668, 1.442695
  %v770 = vpow.pop %v769
  %v771 = vmul.f32 %v669, 1.442695
  %v772 = vpow.pop %v771
  %v773 = vmul.f32 %v670, 1.442695
  %v774 = vpow.pop %v773
  %v775 = vmul.f32 %v671, 1.442695
  %v776 = vpow.pop %v775
  %v777 = vmul.f32 %v672, 1.442695
  %v778 = vpow.pop %v777
  %v779 = vmul.f32 %v673, 1.442695
  %v780 = vpow.pop %v779
  %v781 = vmul.f32 %v674, 1.442695
  %v782 = vpow.pop %v781
  %v783 = vmul.f32 %v675, 1.442695
  %v784 = vpow.pop %v783
  %v785 = vmul.f32 %v676, 1.442695
  %v786 = vpow.pop %v785
  %v787 = vmul.f32 %v677, 1.442695
  %v788 = vpow.pop %v787
  %v789 = vmul.f32 %v678, 1.442695
  %v790 = vpow.pop %v789
  %v791 = vmul.f32 %v679, 1.442695
  %v792 = vpow.pop %v791
  %v793 = vmul.f32 %v680, 1.442695
  %v794 = vpow.pop %v793
  %v795 = vmul.f32 %v681, 1.442695
  %v796 = vpow.pop %v795
  %v797 = vmul.f32 %v682, 1.442695
  %v798 = vpow.pop %v797
  %v799 = vmul.f32 %v683, 1.442695
  %v800 = vpow.pop %v799
  %v801 = vmul.f32 %v684, 1.442695
  %v802 = vpow.pop %v801
  %v803 = vmul.f32 %v685, 1.442695
  %v804 = vpow.pop %v803
  %v805 = vmul.f32 %v686, 1.442695
  %v806 = vpow.pop %v805
  %v807 = vmul.f32 %v687, 1.442695
  %v808 = vpow.pop %v807
  %v809 = vmul.f32 %v688, 1.442695
  %v810 = vpow.pop %v809
  %v811 = vmul.f32 %v689, 1.442695
  %v812 = vpow.pop %v811
  %v813 = vmul.f32 %v690, 1.442695
  %v814 = vpow.pop %v813
  %v815 = vmul.f32 %v691, 1.442695
  %v816 = vpow.pop %v815
  %v817 = vmul.f32 %v692, 1.442695
  %v818 = vpow.pop %v817
  %v819 = vmul.f32 %v693, 1.442695
  %v820 = vpow.pop %v819
  %v821 = vmul.f32 %v694, 1.442695
  %v822 = vpow.pop %v821
  %v823 = vadd.f32 %v696, 1.0
  %v824 = vadd.f32 %v698, 1.0
  %v825 = vadd.f32 %v700, 1.0
  %v826 = vadd.f32 %v702, 1.0
  %v827 = vadd.f32 %v704, 1.0
  %v828 = vadd.f32 %v706, 1.0
  %v829 = vadd.f32 %v708, 1.0
  %v830 = vadd.f32 %v710, 1.0
  %v831 = vadd.f32 %v712, 1.0
  %v832 = vadd.f32 %v714, 1.0
  %v833 = vadd.f32 %v716, 1.0
  %v834 = vadd.f32 %v718, 1.0
  %v835 = vadd.f32 %v720, 1.0
  %v836 = vadd.f32 %v722, 1.0
  %v837 = vadd.f32 %v724, 1.0
  %v838 = vadd.f32 %v726, 1.0
  %v839 = vadd.f32 %v728, 1.0
  %v840 = vadd.f32 %v730, 1.0
  %v841 = vadd.f32 %v732, 1.0
  %v842 = vadd.f32 %v734, 1.0
  %v843 = vadd.f32 %v736, 1.0
  %v844 = vadd.f32 %v738, 1.0
  %v845 = vadd.f32 %v740, 1.0
  %v846 = vadd.f32 %v742, 1.0
  %v847 = vadd.f32 %v744, 1.0
  %v848 = vadd.f32 %v746, 1.0
  %v849 = vadd.f32 %v748, 1.0
  %v850 = vadd.f32 %v750, 1.0
  %v851 = vadd.f32 %v752, 1.0
  %v852 = vadd.f32 %v754, 1.0
  %v853 = vadd.f32 %v756, 1.0
  %v854 = vadd.f32 %v758, 1.0
  %v855 = vadd.f32 %v760, 1.0
  %v856 = vadd.f32 %v762, 1.0
  %v857 = vadd.f32 %v764, 1.0
  %v858 = vadd.f32 %v766, 1.0
  %v859 = vadd.f32 %v768, 1.0
  %v860 = vadd.f32 %v770, 1.0
  %v861 = vadd.f32 %v772, 1.0
  %v862 = vadd.f32 %v774, 1.0
  %v863 = vadd.f32 %v776, 1.0
  %v864 = vadd.f32 %v778, 1.0
  %v865 = vadd.f32 %v780, 1.0
  %v866 = vadd.f32 %v782, 1.0
  %v867 = vadd.f32 %v784, 1.0
  %v868 = vadd.f32 %v786, 1.0
  %v869 = vadd.f32 %v788, 1.0
  %v870 = vadd.f32 %v790, 1.0
  %v871 = vadd.f32 %v792, 1.0
  %v872 = vadd.f32 %v794, 1.0
  %v873 = vadd.f32 %v796, 1.0
  %v874 = vadd.f32 %v798, 1.0
  %v875 = vadd.f32 %v800, 1.0
  %v876 = vadd.f32 %v802, 1.0
  %v877 = vadd.f32 %v804, 1.0
  %v878 = vadd.f32 %v806, 1.0
  %v879 = vadd.f32 %v808, 1.0
  %v880 = vadd.f32 %v810, 1.0
  %v881 = vadd.f32 %v812, 1.0
  %v882 = vadd.f32 %v814, 1.0
  %v883 = vadd.f32 %v816, 1.0
  %v884 = vadd.f32 %v818, 1.0
  %v885 = vadd.f32 %v820, 1.0
  %v886 = vadd.f32 %v822, 1.0
  %v887 = vrcp.pop %v823
  %v888 = vrcp.pop %v824
  %v889 = vrcp.pop %v825
  %v890 = vrcp.pop %v826
  %v891 = vrcp.pop %v827
  %v892 = vrcp.pop %v828
  %v893 = vrcp.pop %v829
  %v894 = vrcp.pop %v830
  %v895 = vrcp.pop %v831
  %v896 = vrcp.pop %v832
  %v897 = vrcp.pop %v833
  %v898 = vrcp.pop %v834
  %v899 = vrcp.pop %v835
  %v900 = vrcp.pop %v836
  %v901 = vrcp.pop %v837
  %v902 = vrcp.pop %v838
  %v903 = vrcp.pop %v839
  %v904 = vrcp.pop %v840
  %v905 = vrcp.pop %v841
  %v906 = vrcp.pop %v842
  %v907 = vrcp.pop %v843
  %v908 = vrcp.pop %v844
  %v909 = vrcp.pop %v845
  %v910 = vrcp.pop %v846
  %v911 = vrcp.pop %v847
  %v912 = vrcp.pop %v848
  %v913 = vrcp.pop %v849
  %v914 = vrcp.pop %v850
  %v915 = vrcp.pop %v851
  %v916 = vrcp.pop %v852
  %v917 = vrcp.pop %v853
  %v918 = vrcp.pop %v854
  %v919 = vrcp.pop %v855
  %v920 = vrcp.pop %v856
  %v921 = vrcp.pop %v857
  %v922 = vrcp.pop %v858
  %v923 = vrcp.pop %v859
  %v924 = vrcp.pop %v860
  %v925 = vrcp.pop %v861
  %v926 = vrcp.pop %v862
  %v927 = vrcp.pop %v863
  %v928 = vrcp.pop %v864
  %v929 = vrcp.pop %v865
  %v930 = vrcp.pop %v866
  %v931 = vrcp.pop %v867
  %v932 = vrcp.pop %v868
  %v933 = vrcp.pop %v869
  %v934 = vrcp.pop %v870
  %v935 = vrcp.pop %v871
  %v936 = vrcp.pop %v872
  %v937 = vrcp.pop %v873
  %v938 = vrcp.pop %v874
  %v939 = vrcp.pop %v875
  %v940 = vrcp.pop %v876
  %v941 = vrcp.pop %v877
  %v942 = vrcp.pop %v878
  %v943 = vrcp.pop %v879
  %v944 = vrcp.pop %v880
  %v945 = vrcp.pop %v881
  %v946 = vrcp.pop %v882
  %v947 = vrcp.pop %v883
  %v948 = vrcp.pop %v884
  %v949 = vrcp.pop %v885
  %v950 = vrcp.pop %v886
  %v951 = vmul.f32 %v377, %v887
  %v952 = vmul.f32 %v380, %v888
  %v953 = vmul.f32 %v385, %v889
  %v954 = vmul.f32 %v388, %v890
  %v955 = vmul.f32 %v393, %v891
  %v956 = vmul.f32 %v396, %v892
  %v957 = vmul.f32 %v401, %v893
  %v958 = vmul.f32 %v404, %v894
  %v959 = vmul.f32 %v409, %v895
  %v960 = vmul.f32 %v412, %v896
  %v961 = vmul.f32 %v417, %v897
  %v962 = vmul.f32 %v420, %v898
  %v963 = vmul.f32 %v425, %v899
  %v964 = vmul.f32 %v428, %v900
  %v965 = vmul.f32 %v433, %v901
  %v966 = vmul.f32 %v436, %v902
  %v967 = vmul.f32 %v441, %v903
  %v968 = vmul.f32 %v444, %v904
  %v969 = vmul.f32 %v449, %v905
  %v970 = vmul.f32 %v452, %v906
  %v971 = vmul.f32 %v457, %v907
  %v972 = vmul.f32 %v460, %v908
  %v973 = vmul.f32 %v465, %v909
  %v974 = vmul.f32 %v468, %v910
  %v975 = vmul.f32 %v473, %v911
  %v976 = vmul.f32 %v476, %v912
  %v977 = vmul.f32 %v481, %v913
  %v978 = vmul.f32 %v484, %v914
  %v979 = vmul.f32 %v489, %v915
  %v980 = vmul.f32 %v492, %v916
  %v981 = vmul.f32 %v497, %v917
  %v982 = vmul.f32 %v500, %v918
  %v983 = vmul.f32 %v505, %v919
  %v984 = vmul.f32 %v508, %v920
  %v985 = vmul.f32 %v513, %v921
  %v986 = vmul.f32 %v516, %v922
  %v987 = vmul.f32 %v521, %v923
  %v988 = vmul.f32 %v524, %v924
  %v989 = vmul.f32 %v529, %v925
  %v990 = vmul.f32 %v532, %v926
  %v991 = vmul.f32 %v537, %v927
  %v992 = vmul.f32 %v540, %v928
  %v993 = vmul.f32 %v545, %v929
  %v994 = vmul.f32 %v548, %v930
  %v995 = vmul.f32 %v553, %v931
  %v996 = vmul.f32 %v556, %v932
  %v997 = vmul.f32 %v561, %v933
  %v998 = vmul.f32 %v564, %v934
  %v999 = vmul.f32 %v569, %v935
  %v1000 = vmul.f32 %v572, %v936
  %v1001 = vmul.f32 %v577, %v937
  %v1002 = vmul.f32 %v580, %v938
  %v1003 = vmul.f32 %v585, %v939
  %v1004 = vmul.f32 %v588, %v940
  %v1005 = vmul.f32 %v593, %v941
  %v1006 = vmul.f32 %v596, %v942
  %v1007 = vmul.f32 %v601, %v943
  %v1008 = vmul.f32 %v604, %v944
  %v1009 = vmul.f32 %v609, %v945
  %v1010 = vmul.f32 %v612, %v946
  %v1011 = vmul.f32 %v617, %v947
  %v1012 = vmul.f32 %v620, %v948
  %v1013 = vmul.f32 %v625, %v949
  %v1014 = vmul.f32 %v628, %v950
  %v1015 = vpack.c.bf16 %v952, %v951
  %v1016 = vpack.c.bf16 %v954, %v953
  %v1017 = vpack.c.bf16 %v956, %v955
  %v1018 = vpack.c.bf16 %v958, %v957
  %v1019 = vpack.c.bf16 %v960, %v959
  %v1020 = vpack.c.bf16 %v962, %v961
  %v1021 = vpack.c.bf16 %v964, %v963
  %v1022 = vpack.c.bf16 %v966, %v965
  %v1023 = vpack.c.bf16 %v968, %v967
  %v1024 = vpack.c.bf16 %v970, %v969
  %v1025 = vpack.c.bf16 %v972, %v971
  %v1026 = vpack.c.bf16 %v974, %v973
  %v1027 = vpack.c.bf16 %v976, %v975
  %v1028 = vpack.c.bf16 %v978, %v977
  %v1029 = vpack.c.bf16 %v980, %v979
  %v1030 = vpack.c.bf16 %v982, %v981
  %v1031 = vpack.c.bf16 %v984, %v983
  %v1032 = vpack.c.bf16 %v986, %v985
  %v1033 = vpack.c.bf16 %v988, %v987
  %v1034 = vpack.c.bf16 %v990, %v989
  %v1035 = vpack.c.bf16 %v992, %v991
  %v1036 = vpack.c.bf16 %v994, %v993
  %v1037 = vpack.c.bf16 %v996, %v995
  %v1038 = vpack.c.bf16 %v998, %v997
  %v1039 = vpack.c.bf16 %v1000, %v999
  %v1040 = vpack.c.bf16 %v1002, %v1001
  %v1041 = vpack.c.bf16 %v1004, %v1003
  %v1042 = vpack.c.bf16 %v1006, %v1005
  %v1043 = vpack.c.bf16 %v1008, %v1007
  %v1044 = vpack.c.bf16 %v1010, %v1009
  %v1045 = vpack.c.bf16 %v1012, %v1011
  %v1046 = vpack.c.bf16 %v1014, %v1013
  %v1079 = vunpack.c.l.b16 %v1015
  %v1080 = vunpack.c.h.b16 %v1015
  %v1081 = vunpack.c.l.b16 %v1016
  %v1082 = vunpack.c.h.b16 %v1016
  %v1083 = vunpack.c.l.b16 %v1017
  %v1084 = vunpack.c.h.b16 %v1017
  %v1085 = vunpack.c.l.b16 %v1018
  %v1086 = vunpack.c.h.b16 %v1018
  %v1087 = vunpack.c.l.b16 %v1019
  %v1088 = vunpack.c.h.b16 %v1019
  %v1089 = vunpack.c.l.b16 %v1020
  %v1090 = vunpack.c.h.b16 %v1020
  %v1091 = vunpack.c.l.b16 %v1021
  %v1092 = vunpack.c.h.b16 %v1021
  %v1093 = vunpack.c.l.b16 %v1022
  %v1094 = vunpack.c.h.b16 %v1022
  %v1095 = vunpack.c.l.b16 %v1023
  %v1096 = vunpack.c.h.b16 %v1023
  %v1097 = vunpack.c.l.b16 %v1024
  %v1098 = vunpack.c.h.b16 %v1024
  %v1099 = vunpack.c.l.b16 %v1025
  %v1100 = vunpack.c.h.b16 %v1025
  %v1101 = vunpack.c.l.b16 %v1026
  %v1102 = vunpack.c.h.b16 %v1026
  %v1103 = vunpack.c.l.b16 %v1027
  %v1104 = vunpack.c.h.b16 %v1027
  %v1105 = vunpack.c.l.b16 %v1028
  %v1106 = vunpack.c.h.b16 %v1028
  %v1107 = vunpack.c.l.b16 %v1029
  %v1108 = vunpack.c.h.b16 %v1029
  %v1109 = vunpack.c.l.b16 %v1030
  %v1110 = vunpack.c.h.b16 %v1030
  %v1111 = vunpack.c.l.b16 %v1031
  %v1112 = vunpack.c.h.b16 %v1031
  %v1113 = vunpack.c.l.b16 %v1032
  %v1114 = vunpack.c.h.b16 %v1032
  %v1115 = vunpack.c.l.b16 %v1033
  %v1116 = vunpack.c.h.b16 %v1033
  %v1117 = vunpack.c.l.b16 %v1034
  %v1118 = vunpack.c.h.b16 %v1034
  %v1119 = vunpack.c.l.b16 %v1035
  %v1120 = vunpack.c.h.b16 %v1035
  %v1121 = vunpack.c.l.b16 %v1036
  %v1122 = vunpack.c.h.b16 %v1036
  %v1123 = vunpack.c.l.b16 %v1037
  %v1124 = vunpack.c.h.b16 %v1037
  %v1125 = vunpack.c.l.b16 %v1038
  %v1126 = vunpack.c.h.b16 %v1038
  %v1127 = vunpack.c.l.b16 %v1039
  %v1128 = vunpack.c.h.b16 %v1039
  %v1129 = vunpack.c.l.b16 %v1040
  %v1130 = vunpack.c.h.b16 %v1040
  %v1131 = vunpack.c.l.b16 %v1041
  %v1132 = vunpack.c.h.b16 %v1041
  %v1133 = vunpack.c.l.b16 %v1042
  %v1134 = vunpack.c.h.b16 %v1042
  %v1135 = vunpack.c.l.b16 %v1043
  %v1136 = vunpack.c.h.b16 %v1043
  %v1137 = vunpack.c.l.b16 %v1044
  %v1138 = vunpack.c.h.b16 %v1044
  %v1139 = vunpack.c.l.b16 %v1045
  %v1140 = vunpack.c.h.b16 %v1045
  %v1141 = vunpack.c.l.b16 %v1046
  %v1142 = vunpack.c.h.b16 %v1046
  %v1143 = vpack.c.b16 %v1079, %v1079
  %v1144 = vpack.c.b16 %v1080, %v1080
  %v1145 = vpack.c.b16 %v1081, %v1081
  %v1146 = vpack.c.b16 %v1082, %v1082
  %v1147 = vpack.c.b16 %v1083, %v1083
  %v1148 = vpack.c.b16 %v1084, %v1084
  %v1149 = vpack.c.b16 %v1085, %v1085
  %v1150 = vpack.c.b16 %v1086, %v1086
  %v1151 = vpack.c.b16 %v1087, %v1087
  %v1152 = vpack.c.b16 %v1088, %v1088
  %v1153 = vpack.c.b16 %v1089, %v1089
  %v1154 = vpack.c.b16 %v1090, %v1090
  %v1155 = vpack.c.b16 %v1091, %v1091
  %v1156 = vpack.c.b16 %v1092, %v1092
  %v1157 = vpack.c.b16 %v1093, %v1093
  %v1158 = vpack.c.b16 %v1094, %v1094
  %v1159 = vpack.c.b16 %v1095, %v1095
  %v1160 = vpack.c.b16 %v1096, %v1096
  %v1161 = vpack.c.b16 %v1097, %v1097
  %v1162 = vpack.c.b16 %v1098, %v1098
  %v1163 = vpack.c.b16 %v1099, %v1099
  %v1164 = vpack.c.b16 %v1100, %v1100
  %v1165 = vpack.c.b16 %v1101, %v1101
  %v1166 = vpack.c.b16 %v1102, %v1102
  %v1167 = vpack.c.b16 %v1103, %v1103
  %v1168 = vpack.c.b16 %v1104, %v1104
  %v1169 = vpack.c.b16 %v1105, %v1105
  %v1170 = vpack.c.b16 %v1106, %v1106
  %v1171 = vpack.c.b16 %v1107, %v1107
  %v1172 = vpack.c.b16 %v1108, %v1108
  %v1173 = vpack.c.b16 %v1109, %v1109
  %v1174 = vpack.c.b16 %v1110, %v1110
  %v1175 = vpack.c.b16 %v1111, %v1111
  %v1176 = vpack.c.b16 %v1112, %v1112
  %v1177 = vpack.c.b16 %v1113, %v1113
  %v1178 = vpack.c.b16 %v1114, %v1114
  %v1179 = vpack.c.b16 %v1115, %v1115
  %v1180 = vpack.c.b16 %v1116, %v1116
  %v1181 = vpack.c.b16 %v1117, %v1117
  %v1182 = vpack.c.b16 %v1118, %v1118
  %v1183 = vpack.c.b16 %v1119, %v1119
  %v1184 = vpack.c.b16 %v1120, %v1120
  %v1185 = vpack.c.b16 %v1121, %v1121
  %v1186 = vpack.c.b16 %v1122, %v1122
  %v1187 = vpack.c.b16 %v1123, %v1123
  %v1188 = vpack.c.b16 %v1124, %v1124
  %v1189 = vpack.c.b16 %v1125, %v1125
  %v1190 = vpack.c.b16 %v1126, %v1126
  %v1191 = vpack.c.b16 %v1127, %v1127
  %v1192 = vpack.c.b16 %v1128, %v1128
  %v1193 = vpack.c.b16 %v1129, %v1129
  %v1194 = vpack.c.b16 %v1130, %v1130
  %v1195 = vpack.c.b16 %v1131, %v1131
  %v1196 = vpack.c.b16 %v1132, %v1132
  %v1197 = vpack.c.b16 %v1133, %v1133
  %v1198 = vpack.c.b16 %v1134, %v1134
  %v1199 = vpack.c.b16 %v1135, %v1135
  %v1200 = vpack.c.b16 %v1136, %v1136
  %v1201 = vpack.c.b16 %v1137, %v1137
  %v1202 = vpack.c.b16 %v1138, %v1138
  %v1203 = vpack.c.b16 %v1139, %v1139
  %v1204 = vpack.c.b16 %v1140, %v1140
  %v1205 = vpack.c.b16 %v1141, %v1141
  %v1206 = vpack.c.b16 %v1142, %v1142
  %1271 = vst [vmem:[%s3] sm:$0xf] %v1143
  %1272 = vst [vmem:[%s3 + $0x4] sm:$0xf] %v1144
  %1273 = vst [vmem:[%s3 + $0x8] sm:$0xf] %v1145
  %1274 = vst [vmem:[%s3 + $0xc] sm:$0xf] %v1146
  %1275 = vst [vmem:[%s3 + $0x10] sm:$0xf] %v1147
  %1276 = vst [vmem:[%s3 + $0x14] sm:$0xf] %v1148
  %1277 = vst [vmem:[%s3 + $0x18] sm:$0xf] %v1149
  %1278 = vst [vmem:[%s3 + $0x1c] sm:$0xf] %v1150
  %1279 = vst [vmem:[%s3 + $0x20] sm:$0xf] %v1151
  %1280 = vst [vmem:[%s3 + $0x24] sm:$0xf] %v1152
  %1281 = vst [vmem:[%s3 + $0x28] sm:$0xf] %v1153
  %1282 = vst [vmem:[%s3 + $0x2c] sm:$0xf] %v1154
  %1283 = vst [vmem:[%s3 + $0x30] sm:$0xf] %v1155
  %1284 = vst [vmem:[%s3 + $0x34] sm:$0xf] %v1156
  %1285 = vst [vmem:[%s3 + $0x38] sm:$0xf] %v1157
  %1286 = vst [vmem:[%s3 + $0x3c] sm:$0xf] %v1158
  %1287 = vst [vmem:[%s3 + $0x40] sm:$0xf] %v1159
  %1288 = vst [vmem:[%s3 + $0x44] sm:$0xf] %v1160
  %1289 = vst [vmem:[%s3 + $0x48] sm:$0xf] %v1161
  %1290 = vst [vmem:[%s3 + $0x4c] sm:$0xf] %v1162
  %1291 = vst [vmem:[%s3 + $0x50] sm:$0xf] %v1163
  %1292 = vst [vmem:[%s3 + $0x54] sm:$0xf] %v1164
  %1293 = vst [vmem:[%s3 + $0x58] sm:$0xf] %v1165
  %1294 = vst [vmem:[%s3 + $0x5c] sm:$0xf] %v1166
  %1295 = vst [vmem:[%s3 + $0x60] sm:$0xf] %v1167
  %1296 = vst [vmem:[%s3 + $0x64] sm:$0xf] %v1168
  %1297 = vst [vmem:[%s3 + $0x68] sm:$0xf] %v1169
  %1298 = vst [vmem:[%s3 + $0x6c] sm:$0xf] %v1170
  %1299 = vst [vmem:[%s3 + $0x70] sm:$0xf] %v1171
  %1300 = vst [vmem:[%s3 + $0x74] sm:$0xf] %v1172
  %1301 = vst [vmem:[%s3 + $0x78] sm:$0xf] %v1173
  %1302 = vst [vmem:[%s3 + $0x7c] sm:$0xf] %v1174
  %1303 = vst [vmem:[%s3 + $0x80] sm:$0xf] %v1175
  %1304 = vst [vmem:[%s3 + $0x84] sm:$0xf] %v1176
  %1305 = vst [vmem:[%s3 + $0x88] sm:$0xf] %v1177
  %1306 = vst [vmem:[%s3 + $0x8c] sm:$0xf] %v1178
  %1307 = vst [vmem:[%s3 + $0x90] sm:$0xf] %v1179
  %1308 = vst [vmem:[%s3 + $0x94] sm:$0xf] %v1180
  %1309 = vst [vmem:[%s3 + $0x98] sm:$0xf] %v1181
  %1310 = vst [vmem:[%s3 + $0x9c] sm:$0xf] %v1182
  %1311 = vst [vmem:[%s3 + $0xa0] sm:$0xf] %v1183
  %1312 = vst [vmem:[%s3 + $0xa4] sm:$0xf] %v1184
  %1313 = vst [vmem:[%s3 + $0xa8] sm:$0xf] %v1185
  %1314 = vst [vmem:[%s3 + $0xac] sm:$0xf] %v1186
  %1315 = vst [vmem:[%s3 + $0xb0] sm:$0xf] %v1187
  %1316 = vst [vmem:[%s3 + $0xb4] sm:$0xf] %v1188
  %1317 = vst [vmem:[%s3 + $0xb8] sm:$0xf] %v1189
  %1318 = vst [vmem:[%s3 + $0xbc] sm:$0xf] %v1190
  %1319 = vst [vmem:[%s3 + $0xc0] sm:$0xf] %v1191
  %1320 = vst [vmem:[%s3 + $0xc4] sm:$0xf] %v1192
  %1321 = vst [vmem:[%s3 + $0xc8] sm:$0xf] %v1193
  %1322 = vst [vmem:[%s3 + $0xcc] sm:$0xf] %v1194
  %1323 = vst [vmem:[%s3 + $0xd0] sm:$0xf] %v1195
  %1324 = vst [vmem:[%s3 + $0xd4] sm:$0xf] %v1196
  %1325 = vst [vmem:[%s3 + $0xd8] sm:$0xf] %v1197
  %1326 = vst [vmem:[%s3 + $0xdc] sm:$0xf] %v1198
  %1327 = vst [vmem:[%s3 + $0xe0] sm:$0xf] %v1199
  %1328 = vst [vmem:[%s3 + $0xe4] sm:$0xf] %v1200
  %1329 = vst [vmem:[%s3 + $0xe8] sm:$0xf] %v1201
  %1330 = vst [vmem:[%s3 + $0xec] sm:$0xf] %v1202
  %1331 = vst [vmem:[%s3 + $0xf0] sm:$0xf] %v1203
  %1332 = vst [vmem:[%s3 + $0xf4] sm:$0xf] %v1204
  %1333 = vst [vmem:[%s3 + $0xf8] sm:$0xf] %v1205
  %1334 = vst [vmem:[%s3 + $0xfc] sm:$0xf] %v1206
  // Predicated region
  $region14: #{unetpp_efficientnet_forward.5} parent=0 // pred_check
    _
  $region15: #{unetpp_efficientnet_forward.5} parent=0 // pred_check_branch
    %1336 = sbr.rel (0) target = $region17
  $region16: #{unetpp_efficientnet_forward.5} parent=0 // pred_region
    _
  $region17: #{unetpp_efficientnet_forward.5} parent=0 // pred_fallthru
    _
  // Predicated region
  $region18: #{unetpp_efficientnet_forward.5} parent=0 // pred_check
    _
  $region19: #{unetpp_efficientnet_forward.5} parent=0 // pred_check_branch
    %1338 = sbr.rel (0) target = $region21
  $region20: #{unetpp_efficientnet_forward.5} parent=0 // pred_region
    _
  $region21: #{unetpp_efficientnet_forward.5} parent=0 // pred_fallthru
    _

// kernel: unetpp_efficientnet_forward.6
$region0: #{unetpp_efficientnet_forward.6}
  #allocation0 [shape = 'u32[]', space=smem, size = 0x4, offset = 0x4, fixed_abs, tag = 'smem constant byte address 0x4 - core index']
  #allocation1 [shape = 'u32[144,128]{1,0:T(1,128)}', space=vmem, size = 0x12000, scoped, tag = 'internal scratch']
  %s0 = inlined_call_operand.vmem [shape: bf16[128,256], index: 0, kind: input, shape index: {}]
  %s1 = inlined_call_operand.vmem [shape: bf16[256,128], index: 1, kind: input, shape index: {}]
  %s2 = inlined_call_operand.vmem [shape: f32[1,128], index: 2, kind: input, shape index: {}]
  %s3 = inlined_call_operand.vmem [shape: bf16[128,128], index: 3, kind: output, shape index: {}]
  %s4 = sld [smem:[#allocation0]]
  $region22: #{unetpp_efficientnet_forward.6} parent=0
    _
  %s6 = ssub.s32 1, %s4
  %s7 = scalar_select 0, %s6, %s4
  // Predicated region
  $region2: #{unetpp_efficientnet_forward.6} parent=0 // pred_check
    _
  $region3: #{unetpp_efficientnet_forward.6} parent=0 // pred_check_branch
    %9 = sbr.rel (0) target = $region5
  $region4: #{unetpp_efficientnet_forward.6} parent=0 // pred_region
    _
  $region5: #{unetpp_efficientnet_forward.6} parent=0 // pred_fallthru
    _
  // Predicated region
  $region6: #{unetpp_efficientnet_forward.6} parent=0 // pred_check
    _
  $region7: #{unetpp_efficientnet_forward.6} parent=0 // pred_check_branch
    %11 = sbr.rel (0) target = $region9
  $region8: #{unetpp_efficientnet_forward.6} parent=0 // pred_region
    _
  $region9: #{unetpp_efficientnet_forward.6} parent=0 // pred_fallthru
    _
  // Predicated region
  $region10: #{unetpp_efficientnet_forward.6} parent=0 // pred_check
    _
  $region11: #{unetpp_efficientnet_forward.6} parent=0 // pred_check_branch
    %13 = sbr.rel (0) target = $region13
  $region12: #{unetpp_efficientnet_forward.6} parent=0 // pred_region
    _
  $region13: #{unetpp_efficientnet_forward.6} parent=0 // pred_fallthru
    _
  %v15 = vld [vmem:[%s0] sm:$0xff]
  %v16 = vld [vmem:[%s0 + $0x8] sm:$0xff]
  %v17 = vld [vmem:[%s0 + $0x10] sm:$0xff]
  %v18 = vld [vmem:[%s0 + $0x18] sm:$0xff]
  %v19 = vld [vmem:[%s0 + $0x20] sm:$0xff]
  %v20 = vld [vmem:[%s0 + $0x28] sm:$0xff]
  %v21 = vld [vmem:[%s0 + $0x30] sm:$0xff]
  %v22 = vld [vmem:[%s0 + $0x38] sm:$0xff]
  %v23 = vld [vmem:[%s0 + $0x40] sm:$0xff]
  %v24 = vld [vmem:[%s0 + $0x48] sm:$0xff]
  %v25 = vld [vmem:[%s0 + $0x50] sm:$0xff]
  %v26 = vld [vmem:[%s0 + $0x58] sm:$0xff]
  %v27 = vld [vmem:[%s0 + $0x60] sm:$0xff]
  %v28 = vld [vmem:[%s0 + $0x68] sm:$0xff]
  %v29 = vld [vmem:[%s0 + $0x70] sm:$0xff]
  %v30 = vld [vmem:[%s0 + $0x78] sm:$0xff]
  %v31 = vld [vmem:[%s1] sm:$0xf]
  %v32 = vld [vmem:[%s1 + $0x4] sm:$0xf]
  %v33 = vld [vmem:[%s1 + $0x8] sm:$0xf]
  %v34 = vld [vmem:[%s1 + $0xc] sm:$0xf]
  %v35 = vld [vmem:[%s1 + $0x10] sm:$0xf]
  %v36 = vld [vmem:[%s1 + $0x14] sm:$0xf]
  %v37 = vld [vmem:[%s1 + $0x18] sm:$0xf]
  %v38 = vld [vmem:[%s1 + $0x1c] sm:$0xf]
  %v39 = vld [vmem:[%s1 + $0x20] sm:$0xf]
  %v40 = vld [vmem:[%s1 + $0x24] sm:$0xf]
  %v41 = vld [vmem:[%s1 + $0x28] sm:$0xf]
  %v42 = vld [vmem:[%s1 + $0x2c] sm:$0xf]
  %v43 = vld [vmem:[%s1 + $0x30] sm:$0xf]
  %v44 = vld [vmem:[%s1 + $0x34] sm:$0xf]
  %v45 = vld [vmem:[%s1 + $0x38] sm:$0xf]
  %v46 = vld [vmem:[%s1 + $0x3c] sm:$0xf]
  %v47 = vld [vmem:[%s1 + $0x40] sm:$0xf]
  %v48 = vld [vmem:[%s1 + $0x44] sm:$0xf]
  %v49 = vld [vmem:[%s1 + $0x48] sm:$0xf]
  %v50 = vld [vmem:[%s1 + $0x4c] sm:$0xf]
  %v51 = vld [vmem:[%s1 + $0x50] sm:$0xf]
  %v52 = vld [vmem:[%s1 + $0x54] sm:$0xf]
  %v53 = vld [vmem:[%s1 + $0x58] sm:$0xf]
  %v54 = vld [vmem:[%s1 + $0x5c] sm:$0xf]
  %v55 = vld [vmem:[%s1 + $0x60] sm:$0xf]
  %v56 = vld [vmem:[%s1 + $0x64] sm:$0xf]
  %v57 = vld [vmem:[%s1 + $0x68] sm:$0xf]
  %v58 = vld [vmem:[%s1 + $0x6c] sm:$0xf]
  %v59 = vld [vmem:[%s1 + $0x70] sm:$0xf]
  %v60 = vld [vmem:[%s1 + $0x74] sm:$0xf]
  %v61 = vld [vmem:[%s1 + $0x78] sm:$0xf]
  %v62 = vld [vmem:[%s1 + $0x7c] sm:$0xf]
  %v63 = vld [vmem:[%s2] sm:$0x1]
  %v65 = vlaneseq
  %v66 = vshrl.u32 %v65, 7
  %v67 = vsub.s32 0, %v66
  %v68 = vrot.slane %v63, %v67
  %v86 = vunpack.c.l.b16 %v15
  %v87 = vunpack.c.h.b16 %v15
  %v88 = vunpack.c.l.b16 %v16
  %v89 = vunpack.c.h.b16 %v16
  %v90 = vunpack.c.l.b16 %v17
  %v91 = vunpack.c.h.b16 %v17
  %v92 = vunpack.c.l.b16 %v18
  %v93 = vunpack.c.h.b16 %v18
  %v94 = vunpack.c.l.b16 %v19
  %v95 = vunpack.c.h.b16 %v19
  %v96 = vunpack.c.l.b16 %v20
  %v97 = vunpack.c.h.b16 %v20
  %v98 = vunpack.c.l.b16 %v21
  %v99 = vunpack.c.h.b16 %v21
  %v100 = vunpack.c.l.b16 %v22
  %v101 = vunpack.c.h.b16 %v22
  %v102 = vunpack.c.l.b16 %v23
  %v103 = vunpack.c.h.b16 %v23
  %v104 = vunpack.c.l.b16 %v24
  %v105 = vunpack.c.h.b16 %v24
  %v106 = vunpack.c.l.b16 %v25
  %v107 = vunpack.c.h.b16 %v25
  %v108 = vunpack.c.l.b16 %v26
  %v109 = vunpack.c.h.b16 %v26
  %v110 = vunpack.c.l.b16 %v27
  %v111 = vunpack.c.h.b16 %v27
  %v112 = vunpack.c.l.b16 %v28
  %v113 = vunpack.c.h.b16 %v28
  %v114 = vunpack.c.l.b16 %v29
  %v115 = vunpack.c.h.b16 %v29
  %v116 = vunpack.c.l.b16 %v30
  %v117 = vunpack.c.h.b16 %v30
  %v118 = vpack.c.b16 %v88, %v86
  %v119 = vpack.c.b16 %v89, %v87
  %v120 = vpack.c.b16 %v92, %v90
  %v121 = vpack.c.b16 %v93, %v91
  %v122 = vpack.c.b16 %v96, %v94
  %v123 = vpack.c.b16 %v97, %v95
  %v124 = vpack.c.b16 %v100, %v98
  %v125 = vpack.c.b16 %v101, %v99
  %v126 = vpack.c.b16 %v104, %v102
  %v127 = vpack.c.b16 %v105, %v103
  %v128 = vpack.c.b16 %v108, %v106
  %v129 = vpack.c.b16 %v109, %v107
  %v130 = vpack.c.b16 %v112, %v110
  %v131 = vpack.c.b16 %v113, %v111
  %v132 = vpack.c.b16 %v116, %v114
  %v133 = vpack.c.b16 %v117, %v115
  %v182 = vunpack.c.l.b16 %v31
  %v183 = vunpack.c.l.b16 %v32
  %v184 = vunpack.c.l.b16 %v33
  %v185 = vunpack.c.l.b16 %v34
  %v186 = vunpack.c.l.b16 %v35
  %v187 = vunpack.c.l.b16 %v36
  %v188 = vunpack.c.l.b16 %v37
  %v189 = vunpack.c.l.b16 %v38
  %v190 = vunpack.c.l.b16 %v39
  %v191 = vunpack.c.l.b16 %v40
  %v192 = vunpack.c.l.b16 %v41
  %v193 = vunpack.c.l.b16 %v42
  %v194 = vunpack.c.l.b16 %v43
  %v195 = vunpack.c.l.b16 %v44
  %v196 = vunpack.c.l.b16 %v45
  %v197 = vunpack.c.l.b16 %v46
  %v198 = vunpack.c.l.b16 %v47
  %v199 = vunpack.c.l.b16 %v48
  %v200 = vunpack.c.l.b16 %v49
  %v201 = vunpack.c.l.b16 %v50
  %v202 = vunpack.c.l.b16 %v51
  %v203 = vunpack.c.l.b16 %v52
  %v204 = vunpack.c.l.b16 %v53
  %v205 = vunpack.c.l.b16 %v54
  %v206 = vunpack.c.l.b16 %v55
  %v207 = vunpack.c.l.b16 %v56
  %v208 = vunpack.c.l.b16 %v57
  %v209 = vunpack.c.l.b16 %v58
  %v210 = vunpack.c.l.b16 %v59
  %v211 = vunpack.c.l.b16 %v60
  %v212 = vunpack.c.l.b16 %v61
  %v213 = vunpack.c.l.b16 %v62
  %v214 = vpack.c.b16 %v183, %v182
  %v215 = vpack.c.b16 %v185, %v184
  %v216 = vpack.c.b16 %v187, %v186
  %v217 = vpack.c.b16 %v189, %v188
  %v218 = vpack.c.b16 %v191, %v190
  %v219 = vpack.c.b16 %v193, %v192
  %v220 = vpack.c.b16 %v195, %v194
  %v221 = vpack.c.b16 %v197, %v196
  %v222 = vpack.c.b16 %v199, %v198
  %v223 = vpack.c.b16 %v201, %v200
  %v224 = vpack.c.b16 %v203, %v202
  %v225 = vpack.c.b16 %v205, %v204
  %v226 = vpack.c.b16 %v207, %v206
  %v227 = vpack.c.b16 %v209, %v208
  %v228 = vpack.c.b16 %v211, %v210
  %v229 = vpack.c.b16 %v213, %v212
  %246 = vmatprep.subr.bf16.mxu0 0
  %247 = vmatpush1.bf16.msra.mxu0 %v221
  %248 = vmatprep.subr.bf16.mxu0 0
  %249 = vmatpush1.bf16.msra.mxu0 %v220
  %250 = vmatprep.subr.bf16.mxu0 0
  %251 = vmatpush1.bf16.msra.mxu0 %v219
  %252 = vmatprep.subr.bf16.mxu0 0
  %253 = vmatpush1.bf16.msra.mxu0 %v218
  %254 = vmatprep.subr.bf16.mxu0 0
  %255 = vmatpush1.bf16.msra.mxu0 %v217
  %256 = vmatprep.subr.bf16.mxu0 0
  %257 = vmatpush1.bf16.msra.mxu0 %v216
  %258 = vmatprep.subr.bf16.mxu0 0
  %259 = vmatpush1.bf16.msra.mxu0 %v215
  %260 = vmatprep.subr.bf16.mxu0 0
  %261 = vmatpush1.bf16.msra.mxu0 %v214
  %262 = vmatprep.subr.bf16.mxu0 0
  %263 = vmatpush2.bf16.msra.mxu0 %v229
  %264 = vmatprep.subr.bf16.mxu0 0
  %265 = vmatpush2.bf16.msra.mxu0 %v228
  %266 = vmatprep.subr.bf16.mxu0 0
  %267 = vmatpush2.bf16.msra.mxu0 %v227
  %268 = vmatprep.subr.bf16.mxu0 0
  %269 = vmatpush2.bf16.msra.mxu0 %v226
  %270 = vmatprep.subr.bf16.mxu0 0
  %271 = vmatpush2.bf16.msra.mxu0 %v225
  %272 = vmatprep.subr.bf16.mxu0 0
  %273 = vmatpush2.bf16.msra.mxu0 %v224
  %274 = vmatprep.subr.bf16.mxu0 0
  %275 = vmatpush2.bf16.msra.mxu0 %v223
  %276 = vmatprep.subr.bf16.mxu0 0
  %277 = vmatpush2.bf16.msra.mxu0 %v222
  %278 = vmatprep.mubr.bf16.mxu0 %v119
  %279 = vmatmul.mubr.bf16.gmra.mxu0 %v118
  %v280 = vpop.f32.mrf.mxu0
  %v281 = vadd.f32 %v68, %v280
  %v282 = vpop.f32.mrf.mxu0
  %v283 = vpop.f32.mrf.mxu0
  %v284 = vadd.f32 %v68, %v283
  %v285 = vpop.f32.mrf.mxu0
  %286 = vmatprep.mubr.bf16.mxu0 %v121
  %287 = vmatmul.mubr.bf16.gmra.mxu0 %v120
  %v288 = vpop.f32.mrf.mxu0
  %v289 = vadd.f32 %v68, %v288
  %v290 = vpop.f32.mrf.mxu0
  %v291 = vpop.f32.mrf.mxu0
  %v292 = vadd.f32 %v68, %v291
  %v293 = vpop.f32.mrf.mxu0
  %294 = vmatprep.mubr.bf16.mxu0 %v123
  %295 = vmatmul.mubr.bf16.gmra.mxu0 %v122
  %v296 = vpop.f32.mrf.mxu0
  %v297 = vadd.f32 %v68, %v296
  %v298 = vpop.f32.mrf.mxu0
  %v299 = vpop.f32.mrf.mxu0
  %v300 = vadd.f32 %v68, %v299
  %v301 = vpop.f32.mrf.mxu0
  %302 = vmatprep.mubr.bf16.mxu0 %v125
  %303 = vmatmul.mubr.bf16.gmra.mxu0 %v124
  %v304 = vpop.f32.mrf.mxu0
  %v305 = vadd.f32 %v68, %v304
  %v306 = vpop.f32.mrf.mxu0
  %v307 = vpop.f32.mrf.mxu0
  %v308 = vadd.f32 %v68, %v307
  %v309 = vpop.f32.mrf.mxu0
  %310 = vmatprep.mubr.bf16.mxu0 %v127
  %311 = vmatmul.mubr.bf16.gmra.mxu0 %v126
  %v312 = vpop.f32.mrf.mxu0
  %v313 = vadd.f32 %v68, %v312
  %v314 = vpop.f32.mrf.mxu0
  %v315 = vpop.f32.mrf.mxu0
  %v316 = vadd.f32 %v68, %v315
  %v317 = vpop.f32.mrf.mxu0
  %318 = vmatprep.mubr.bf16.mxu0 %v129
  %319 = vmatmul.mubr.bf16.gmra.mxu0 %v128
  %v320 = vpop.f32.mrf.mxu0
  %v321 = vadd.f32 %v68, %v320
  %v322 = vpop.f32.mrf.mxu0
  %v323 = vpop.f32.mrf.mxu0
  %v324 = vadd.f32 %v68, %v323
  %v325 = vpop.f32.mrf.mxu0
  %326 = vmatprep.mubr.bf16.mxu0 %v131
  %327 = vmatmul.mubr.bf16.gmra.mxu0 %v130
  %v328 = vpop.f32.mrf.mxu0
  %v329 = vadd.f32 %v68, %v328
  %v330 = vpop.f32.mrf.mxu0
  %v331 = vpop.f32.mrf.mxu0
  %v332 = vadd.f32 %v68, %v331
  %v333 = vpop.f32.mrf.mxu0
  %334 = vmatprep.mubr.bf16.mxu0 %v133
  %335 = vmatmul.mubr.bf16.gmra.mxu0 %v132
  %v336 = vpop.f32.mrf.mxu0
  %v337 = vadd.f32 %v68, %v336
  %v338 = vpop.f32.mrf.mxu0
  %v339 = vpop.f32.mrf.mxu0
  %v340 = vadd.f32 %v68, %v339
  %v341 = vpop.f32.mrf.mxu0
  %342 = vdwg.mxu0
  %v343 = vsub.f32 0.0, %v281
  %v344 = vsub.f32 0.0, %v284
  %v345 = vsub.f32 0.0, %v289
  %v346 = vsub.f32 0.0, %v292
  %v347 = vsub.f32 0.0, %v297
  %v348 = vsub.f32 0.0, %v300
  %v349 = vsub.f32 0.0, %v305
  %v350 = vsub.f32 0.0, %v308
  %v351 = vsub.f32 0.0, %v313
  %v352 = vsub.f32 0.0, %v316
  %v353 = vsub.f32 0.0, %v321
  %v354 = vsub.f32 0.0, %v324
  %v355 = vsub.f32 0.0, %v329
  %v356 = vsub.f32 0.0, %v332
  %v357 = vsub.f32 0.0, %v337
  %v358 = vsub.f32 0.0, %v340
  %v359 = vmul.f32 %v343, 1.442695
  %v360 = vpow.pop %v359
  %v361 = vmul.f32 %v344, 1.442695
  %v362 = vpow.pop %v361
  %v363 = vmul.f32 %v345, 1.442695
  %v364 = vpow.pop %v363
  %v365 = vmul.f32 %v346, 1.442695
  %v366 = vpow.pop %v365
  %v367 = vmul.f32 %v347, 1.442695
  %v368 = vpow.pop %v367
  %v369 = vmul.f32 %v348, 1.442695
  %v370 = vpow.pop %v369
  %v371 = vmul.f32 %v349, 1.442695
  %v372 = vpow.pop %v371
  %v373 = vmul.f32 %v350, 1.442695
  %v374 = vpow.pop %v373
  %v375 = vmul.f32 %v351, 1.442695
  %v376 = vpow.pop %v375
  %v377 = vmul.f32 %v352, 1.442695
  %v378 = vpow.pop %v377
  %v379 = vmul.f32 %v353, 1.442695
  %v380 = vpow.pop %v379
  %v381 = vmul.f32 %v354, 1.442695
  %v382 = vpow.pop %v381
  %v383 = vmul.f32 %v355, 1.442695
  %v384 = vpow.pop %v383
  %v385 = vmul.f32 %v356, 1.442695
  %v386 = vpow.pop %v385
  %v387 = vmul.f32 %v357, 1.442695
  %v388 = vpow.pop %v387
  %v389 = vmul.f32 %v358, 1.442695
  %v390 = vpow.pop %v389
  %v391 = vadd.f32 %v360, 1.0
  %v392 = vadd.f32 %v362, 1.0
  %v393 = vadd.f32 %v364, 1.0
  %v394 = vadd.f32 %v366, 1.0
  %v395 = vadd.f32 %v368, 1.0
  %v396 = vadd.f32 %v370, 1.0
  %v397 = vadd.f32 %v372, 1.0
  %v398 = vadd.f32 %v374, 1.0
  %v399 = vadd.f32 %v376, 1.0
  %v400 = vadd.f32 %v378, 1.0
  %v401 = vadd.f32 %v380, 1.0
  %v402 = vadd.f32 %v382, 1.0
  %v403 = vadd.f32 %v384, 1.0
  %v404 = vadd.f32 %v386, 1.0
  %v405 = vadd.f32 %v388, 1.0
  %v406 = vadd.f32 %v390, 1.0
  %v407 = vrcp.pop %v391
  %v408 = vrcp.pop %v392
  %v409 = vrcp.pop %v393
  %v410 = vrcp.pop %v394
  %v411 = vrcp.pop %v395
  %v412 = vrcp.pop %v396
  %v413 = vrcp.pop %v397
  %v414 = vrcp.pop %v398
  %v415 = vrcp.pop %v399
  %v416 = vrcp.pop %v400
  %v417 = vrcp.pop %v401
  %v418 = vrcp.pop %v402
  %v419 = vrcp.pop %v403
  %v420 = vrcp.pop %v404
  %v421 = vrcp.pop %v405
  %v422 = vrcp.pop %v406
  %v423 = vmul.f32 %v281, %v407
  %v424 = vmul.f32 %v284, %v408
  %v425 = vmul.f32 %v289, %v409
  %v426 = vmul.f32 %v292, %v410
  %v427 = vmul.f32 %v297, %v411
  %v428 = vmul.f32 %v300, %v412
  %v429 = vmul.f32 %v305, %v413
  %v430 = vmul.f32 %v308, %v414
  %v431 = vmul.f32 %v313, %v415
  %v432 = vmul.f32 %v316, %v416
  %v433 = vmul.f32 %v321, %v417
  %v434 = vmul.f32 %v324, %v418
  %v435 = vmul.f32 %v329, %v419
  %v436 = vmul.f32 %v332, %v420
  %v437 = vmul.f32 %v337, %v421
  %v438 = vmul.f32 %v340, %v422
  %v439 = vpack.c.bf16 %v424, %v423
  %v440 = vpack.c.bf16 %v426, %v425
  %v441 = vpack.c.bf16 %v428, %v427
  %v442 = vpack.c.bf16 %v430, %v429
  %v443 = vpack.c.bf16 %v432, %v431
  %v444 = vpack.c.bf16 %v434, %v433
  %v445 = vpack.c.bf16 %v436, %v435
  %v446 = vpack.c.bf16 %v438, %v437
  %v455 = vunpack.c.l.b16 %v439
  %v456 = vunpack.c.h.b16 %v439
  %v457 = vunpack.c.l.b16 %v440
  %v458 = vunpack.c.h.b16 %v440
  %v459 = vunpack.c.l.b16 %v441
  %v460 = vunpack.c.h.b16 %v441
  %v461 = vunpack.c.l.b16 %v442
  %v462 = vunpack.c.h.b16 %v442
  %v463 = vunpack.c.l.b16 %v443
  %v464 = vunpack.c.h.b16 %v443
  %v465 = vunpack.c.l.b16 %v444
  %v466 = vunpack.c.h.b16 %v444
  %v467 = vunpack.c.l.b16 %v445
  %v468 = vunpack.c.h.b16 %v445
  %v469 = vunpack.c.l.b16 %v446
  %v470 = vunpack.c.h.b16 %v446
  %v471 = vpack.c.b16 %v455, %v455
  %v472 = vpack.c.b16 %v456, %v456
  %v473 = vpack.c.b16 %v457, %v457
  %v474 = vpack.c.b16 %v458, %v458
  %v475 = vpack.c.b16 %v459, %v459
  %v476 = vpack.c.b16 %v460, %v460
  %v477 = vpack.c.b16 %v461, %v461
  %v478 = vpack.c.b16 %v462, %v462
  %v479 = vpack.c.b16 %v463, %v463
  %v480 = vpack.c.b16 %v464, %v464
  %v481 = vpack.c.b16 %v465, %v465
  %v482 = vpack.c.b16 %v466, %v466
  %v483 = vpack.c.b16 %v467, %v467
  %v484 = vpack.c.b16 %v468, %v468
  %v485 = vpack.c.b16 %v469, %v469
  %v486 = vpack.c.b16 %v470, %v470
  %503 = vst [vmem:[%s3] sm:$0xf] %v471
  %504 = vst [vmem:[%s3 + $0x4] sm:$0xf] %v472
  %505 = vst [vmem:[%s3 + $0x8] sm:$0xf] %v473
  %506 = vst [vmem:[%s3 + $0xc] sm:$0xf] %v474
  %507 = vst [vmem:[%s3 + $0x10] sm:$0xf] %v475
  %508 = vst [vmem:[%s3 + $0x14] sm:$0xf] %v476
  %509 = vst [vmem:[%s3 + $0x18] sm:$0xf] %v477
  %510 = vst [vmem:[%s3 + $0x1c] sm:$0xf] %v478
  %511 = vst [vmem:[%s3 + $0x20] sm:$0xf] %v479
  %512 = vst [vmem:[%s3 + $0x24] sm:$0xf] %v480
  %513 = vst [vmem:[%s3 + $0x28] sm:$0xf] %v481
  %514 = vst [vmem:[%s3 + $0x2c] sm:$0xf] %v482
  %515 = vst [vmem:[%s3 + $0x30] sm:$0xf] %v483
  %516 = vst [vmem:[%s3 + $0x34] sm:$0xf] %v484
  %517 = vst [vmem:[%s3 + $0x38] sm:$0xf] %v485
  %518 = vst [vmem:[%s3 + $0x3c] sm:$0xf] %v486
  // Predicated region
  $region14: #{unetpp_efficientnet_forward.6} parent=0 // pred_check
    _
  $region15: #{unetpp_efficientnet_forward.6} parent=0 // pred_check_branch
    %520 = sbr.rel (0) target = $region17
  $region16: #{unetpp_efficientnet_forward.6} parent=0 // pred_region
    _
  $region17: #{unetpp_efficientnet_forward.6} parent=0 // pred_fallthru
    _
  // Predicated region
  $region18: #{unetpp_efficientnet_forward.6} parent=0 // pred_check
    _
  $region19: #{unetpp_efficientnet_forward.6} parent=0 // pred_check_branch
    %522 = sbr.rel (0) target = $region21
  $region20: #{unetpp_efficientnet_forward.6} parent=0 // pred_region
    _
  $region21: #{unetpp_efficientnet_forward.6} parent=0 // pred_fallthru
    _

// kernel: unetpp_efficientnet_forward.7
$region0: #{unetpp_efficientnet_forward.7}
  #allocation0 [shape = 'u32[]', space=smem, size = 0x4, offset = 0x4, fixed_abs, tag = 'smem constant byte address 0x4 - core index']
  #allocation1 [shape = 'u32[144,128]{1,0:T(1,128)}', space=vmem, size = 0x12000, scoped, tag = 'internal scratch']
  %s0 = inlined_call_operand.vmem [shape: bf16[32,256], index: 0, kind: input, shape index: {}]
  %s1 = inlined_call_operand.vmem [shape: bf16[256,128], index: 1, kind: input, shape index: {}]
  %s2 = inlined_call_operand.vmem [shape: f32[1,128], index: 2, kind: input, shape index: {}]
  %s3 = inlined_call_operand.vmem [shape: bf16[32,128], index: 3, kind: output, shape index: {}]
  %s4 = sld [smem:[#allocation0]]
  $region22: #{unetpp_efficientnet_forward.7} parent=0
    _
  %s6 = ssub.s32 1, %s4
  %s7 = scalar_select 0, %s6, %s4
  // Predicated region
  $region2: #{unetpp_efficientnet_forward.7} parent=0 // pred_check
    _
  $region3: #{unetpp_efficientnet_forward.7} parent=0 // pred_check_branch
    %9 = sbr.rel (0) target = $region5
  $region4: #{unetpp_efficientnet_forward.7} parent=0 // pred_region
    _
  $region5: #{unetpp_efficientnet_forward.7} parent=0 // pred_fallthru
    _
  // Predicated region
  $region6: #{unetpp_efficientnet_forward.7} parent=0 // pred_check
    _
  $region7: #{unetpp_efficientnet_forward.7} parent=0 // pred_check_branch
    %11 = sbr.rel (0) target = $region9
  $region8: #{unetpp_efficientnet_forward.7} parent=0 // pred_region
    _
  $region9: #{unetpp_efficientnet_forward.7} parent=0 // pred_fallthru
    _
  // Predicated region
  $region10: #{unetpp_efficientnet_forward.7} parent=0 // pred_check
    _
  $region11: #{unetpp_efficientnet_forward.7} parent=0 // pred_check_branch
    %13 = sbr.rel (0) target = $region13
  $region12: #{unetpp_efficientnet_forward.7} parent=0 // pred_region
    _
  $region13: #{unetpp_efficientnet_forward.7} parent=0 // pred_fallthru
    _
  %v15 = vld [vmem:[%s0] sm:$0xff]
  %v16 = vld [vmem:[%s0 + $0x8] sm:$0xff]
  %v17 = vld [vmem:[%s0 + $0x10] sm:$0xff]
  %v18 = vld [vmem:[%s0 + $0x18] sm:$0xff]
  %v19 = vld [vmem:[%s1] sm:$0xf]
  %v20 = vld [vmem:[%s1 + $0x4] sm:$0xf]
  %v21 = vld [vmem:[%s1 + $0x8] sm:$0xf]
  %v22 = vld [vmem:[%s1 + $0xc] sm:$0xf]
  %v23 = vld [vmem:[%s1 + $0x10] sm:$0xf]
  %v24 = vld [vmem:[%s1 + $0x14] sm:$0xf]
  %v25 = vld [vmem:[%s1 + $0x18] sm:$0xf]
  %v26 = vld [vmem:[%s1 + $0x1c] sm:$0xf]
  %v27 = vld [vmem:[%s1 + $0x20] sm:$0xf]
  %v28 = vld [vmem:[%s1 + $0x24] sm:$0xf]
  %v29 = vld [vmem:[%s1 + $0x28] sm:$0xf]
  %v30 = vld [vmem:[%s1 + $0x2c] sm:$0xf]
  %v31 = vld [vmem:[%s1 + $0x30] sm:$0xf]
  %v32 = vld [vmem:[%s1 + $0x34] sm:$0xf]
  %v33 = vld [vmem:[%s1 + $0x38] sm:$0xf]
  %v34 = vld [vmem:[%s1 + $0x3c] sm:$0xf]
  %v35 = vld [vmem:[%s1 + $0x40] sm:$0xf]
  %v36 = vld [vmem:[%s1 + $0x44] sm:$0xf]
  %v37 = vld [vmem:[%s1 + $0x48] sm:$0xf]
  %v38 = vld [vmem:[%s1 + $0x4c] sm:$0xf]
  %v39 = vld [vmem:[%s1 + $0x50] sm:$0xf]
  %v40 = vld [vmem:[%s1 + $0x54] sm:$0xf]
  %v41 = vld [vmem:[%s1 + $0x58] sm:$0xf]
  %v42 = vld [vmem:[%s1 + $0x5c] sm:$0xf]
  %v43 = vld [vmem:[%s1 + $0x60] sm:$0xf]
  %v44 = vld [vmem:[%s1 + $0x64] sm:$0xf]
  %v45 = vld [vmem:[%s1 + $0x68] sm:$0xf]
  %v46 = vld [vmem:[%s1 + $0x6c] sm:$0xf]
  %v47 = vld [vmem:[%s1 + $0x70] sm:$0xf]
  %v48 = vld [vmem:[%s1 + $0x74] sm:$0xf]
  %v49 = vld [vmem:[%s1 + $0x78] sm:$0xf]
  %v50 = vld [vmem:[%s1 + $0x7c] sm:$0xf]
  %v51 = vld [vmem:[%s2] sm:$0x1]
  %v53 = vlaneseq
  %v54 = vshrl.u32 %v53, 7
  %v55 = vsub.s32 0, %v54
  %v56 = vrot.slane %v51, %v55
  %v62 = vunpack.c.l.b16 %v15
  %v63 = vunpack.c.h.b16 %v15
  %v64 = vunpack.c.l.b16 %v16
  %v65 = vunpack.c.h.b16 %v16
  %v66 = vunpack.c.l.b16 %v17
  %v67 = vunpack.c.h.b16 %v17
  %v68 = vunpack.c.l.b16 %v18
  %v69 = vunpack.c.h.b16 %v18
  %v70 = vpack.c.b16 %v64, %v62
  %v71 = vpack.c.b16 %v65, %v63
  %v72 = vpack.c.b16 %v68, %v66
  %v73 = vpack.c.b16 %v69, %v67
  %v110 = vunpack.c.l.b16 %v19
  %v111 = vunpack.c.l.b16 %v20
  %v112 = vunpack.c.l.b16 %v21
  %v113 = vunpack.c.l.b16 %v22
  %v114 = vunpack.c.l.b16 %v23
  %v115 = vunpack.c.l.b16 %v24
  %v116 = vunpack.c.l.b16 %v25
  %v117 = vunpack.c.l.b16 %v26
  %v118 = vunpack.c.l.b16 %v27
  %v119 = vunpack.c.l.b16 %v28
  %v120 = vunpack.c.l.b16 %v29
  %v121 = vunpack.c.l.b16 %v30
  %v122 = vunpack.c.l.b16 %v31
  %v123 = vunpack.c.l.b16 %v32
  %v124 = vunpack.c.l.b16 %v33
  %v125 = vunpack.c.l.b16 %v34
  %v126 = vunpack.c.l.b16 %v35
  %v127 = vunpack.c.l.b16 %v36
  %v128 = vunpack.c.l.b16 %v37
  %v129 = vunpack.c.l.b16 %v38
  %v130 = vunpack.c.l.b16 %v39
  %v131 = vunpack.c.l.b16 %v40
  %v132 = vunpack.c.l.b16 %v41
  %v133 = vunpack.c.l.b16 %v42
  %v134 = vunpack.c.l.b16 %v43
  %v135 = vunpack.c.l.b16 %v44
  %v136 = vunpack.c.l.b16 %v45
  %v137 = vunpack.c.l.b16 %v46
  %v138 = vunpack.c.l.b16 %v47
  %v139 = vunpack.c.l.b16 %v48
  %v140 = vunpack.c.l.b16 %v49
  %v141 = vunpack.c.l.b16 %v50
  %v142 = vpack.c.b16 %v111, %v110
  %v143 = vpack.c.b16 %v113, %v112
  %v144 = vpack.c.b16 %v115, %v114
  %v145 = vpack.c.b16 %v117, %v116
  %v146 = vpack.c.b16 %v119, %v118
  %v147 = vpack.c.b16 %v121, %v120
  %v148 = vpack.c.b16 %v123, %v122
  %v149 = vpack.c.b16 %v125, %v124
  %v150 = vpack.c.b16 %v127, %v126
  %v151 = vpack.c.b16 %v129, %v128
  %v152 = vpack.c.b16 %v131, %v130
  %v153 = vpack.c.b16 %v133, %v132
  %v154 = vpack.c.b16 %v135, %v134
  %v155 = vpack.c.b16 %v137, %v136
  %v156 = vpack.c.b16 %v139, %v138
  %v157 = vpack.c.b16 %v141, %v140
  %174 = vmatprep.subr.bf16.mxu0 0
  %175 = vmatpush1.bf16.msra.mxu0 %v149
  %176 = vmatprep.subr.bf16.mxu0 0
  %177 = vmatpush1.bf16.msra.mxu0 %v148
  %178 = vmatprep.subr.bf16.mxu0 0
  %179 = vmatpush1.bf16.msra.mxu0 %v147
  %180 = vmatprep.subr.bf16.mxu0 0
  %181 = vmatpush1.bf16.msra.mxu0 %v146
  %182 = vmatprep.subr.bf16.mxu0 0
  %183 = vmatpush1.bf16.msra.mxu0 %v145
  %184 = vmatprep.subr.bf16.mxu0 0
  %185 = vmatpush1.bf16.msra.mxu0 %v144
  %186 = vmatprep.subr.bf16.mxu0 0
  %187 = vmatpush1.bf16.msra.mxu0 %v143
  %188 = vmatprep.subr.bf16.mxu0 0
  %189 = vmatpush1.bf16.msra.mxu0 %v142
  %190 = vmatprep.subr.bf16.mxu0 0
  %191 = vmatpush2.bf16.msra.mxu0 %v157
  %192 = vmatprep.subr.bf16.mxu0 0
  %193 = vmatpush2.bf16.msra.mxu0 %v156
  %194 = vmatprep.subr.bf16.mxu0 0
  %195 = vmatpush2.bf16.msra.mxu0 %v155
  %196 = vmatprep.subr.bf16.mxu0 0
  %197 = vmatpush2.bf16.msra.mxu0 %v154
  %198 = vmatprep.subr.bf16.mxu0 0
  %199 = vmatpush2.bf16.msra.mxu0 %v153
  %200 = vmatprep.subr.bf16.mxu0 0
  %201 = vmatpush2.bf16.msra.mxu0 %v152
  %202 = vmatprep.subr.bf16.mxu0 0
  %203 = vmatpush2.bf16.msra.mxu0 %v151
  %204 = vmatprep.subr.bf16.mxu0 0
  %205 = vmatpush2.bf16.msra.mxu0 %v150
  %206 = vmatprep.mubr.bf16.mxu0 %v71
  %207 = vmatmul.mubr.bf16.gmra.mxu0 %v70
  %v208 = vpop.f32.mrf.mxu0
  %v209 = vadd.f32 %v56, %v208
  %v210 = vpop.f32.mrf.mxu0
  %v211 = vpop.f32.mrf.mxu0
  %v212 = vadd.f32 %v56, %v211
  %v213 = vpop.f32.mrf.mxu0
  %214 = vmatprep.mubr.bf16.mxu0 %v73
  %215 = vmatmul.mubr.bf16.gmra.mxu0 %v72
  %v216 = vpop.f32.mrf.mxu0
  %v217 = vadd.f32 %v56, %v216
  %v218 = vpop.f32.mrf.mxu0
  %v219 = vpop.f32.mrf.mxu0
  %v220 = vadd.f32 %v56, %v219
  %v221 = vpop.f32.mrf.mxu0
  %222 = vdwg.mxu0
  %v223 = vsub.f32 0.0, %v209
  %v224 = vsub.f32 0.0, %v212
  %v225 = vsub.f32 0.0, %v217
  %v226 = vsub.f32 0.0, %v220
  %v227 = vmul.f32 %v223, 1.442695
  %v228 = vpow.pop %v227
  %v229 = vmul.f32 %v224, 1.442695
  %v230 = vpow.pop %v229
  %v231 = vmul.f32 %v225, 1.442695
  %v232 = vpow.pop %v231
  %v233 = vmul.f32 %v226, 1.442695
  %v234 = vpow.pop %v233
  %v235 = vadd.f32 %v228, 1.0
  %v236 = vadd.f32 %v230, 1.0
  %v237 = vadd.f32 %v232, 1.0
  %v238 = vadd.f32 %v234, 1.0
  %v239 = vrcp.pop %v235
  %v240 = vrcp.pop %v236
  %v241 = vrcp.pop %v237
  %v242 = vrcp.pop %v238
  %v243 = vmul.f32 %v209, %v239
  %v244 = vmul.f32 %v212, %v240
  %v245 = vmul.f32 %v217, %v241
  %v246 = vmul.f32 %v220, %v242
  %v247 = vpack.c.bf16 %v244, %v243
  %v248 = vpack.c.bf16 %v246, %v245
  %v251 = vunpack.c.l.b16 %v247
  %v252 = vunpack.c.h.b16 %v247
  %v253 = vunpack.c.l.b16 %v248
  %v254 = vunpack.c.h.b16 %v248
  %v255 = vpack.c.b16 %v251, %v251
  %v256 = vpack.c.b16 %v252, %v252
  %v257 = vpack.c.b16 %v253, %v253
  %v258 = vpack.c.b16 %v254, %v254
  %263 = vst [vmem:[%s3] sm:$0xf] %v255
  %264 = vst [vmem:[%s3 + $0x4] sm:$0xf] %v256
  %265 = vst [vmem:[%s3 + $0x8] sm:$0xf] %v257
  %266 = vst [vmem:[%s3 + $0xc] sm:$0xf] %v258
  // Predicated region
  $region14: #{unetpp_efficientnet_forward.7} parent=0 // pred_check
    _
  $region15: #{unetpp_efficientnet_forward.7} parent=0 // pred_check_branch
    %268 = sbr.rel (0) target = $region17
  $region16: #{unetpp_efficientnet_forward.7} parent=0 // pred_region
    _
  $region17: #{unetpp_efficientnet_forward.7} parent=0 // pred_fallthru
    _
  // Predicated region
  $region18: #{unetpp_efficientnet_forward.7} parent=0 // pred_check
    _
  $region19: #{unetpp_efficientnet_forward.7} parent=0 // pred_check_branch
    %270 = sbr.rel (0) target = $region21
  $region20: #{unetpp_efficientnet_forward.7} parent=0 // pred_region
    _
  $region21: #{unetpp_efficientnet_forward.7} parent=0 // pred_fallthru
    _

// kernel: unetpp_efficientnet_forward.8
$region0: #{unetpp_efficientnet_forward.8}
  #allocation0 [shape = 'u32[]', space=smem, size = 0x4, offset = 0x4, fixed_abs, tag = 'smem constant byte address 0x4 - core index']
  #allocation1 [shape = 'u32[144,128]{1,0:T(1,128)}', space=vmem, size = 0x12000, scoped, tag = 'internal scratch']
  %s0 = inlined_call_operand.vmem [shape: bf16[8,384], index: 0, kind: input, shape index: {}]
  %s1 = inlined_call_operand.vmem [shape: bf16[384,128], index: 1, kind: input, shape index: {}]
  %s2 = inlined_call_operand.vmem [shape: f32[1,128], index: 2, kind: input, shape index: {}]
  %s3 = inlined_call_operand.vmem [shape: bf16[8,128], index: 3, kind: output, shape index: {}]
  %s4 = sld [smem:[#allocation0]]
  $region22: #{unetpp_efficientnet_forward.8} parent=0
    _
  %s6 = ssub.s32 1, %s4
  %s7 = scalar_select 0, %s6, %s4
  // Predicated region
  $region2: #{unetpp_efficientnet_forward.8} parent=0 // pred_check
    _
  $region3: #{unetpp_efficientnet_forward.8} parent=0 // pred_check_branch
    %9 = sbr.rel (0) target = $region5
  $region4: #{unetpp_efficientnet_forward.8} parent=0 // pred_region
    _
  $region5: #{unetpp_efficientnet_forward.8} parent=0 // pred_fallthru
    _
  // Predicated region
  $region6: #{unetpp_efficientnet_forward.8} parent=0 // pred_check
    _
  $region7: #{unetpp_efficientnet_forward.8} parent=0 // pred_check_branch
    %11 = sbr.rel (0) target = $region9
  $region8: #{unetpp_efficientnet_forward.8} parent=0 // pred_region
    _
  $region9: #{unetpp_efficientnet_forward.8} parent=0 // pred_fallthru
    _
  // Predicated region
  $region10: #{unetpp_efficientnet_forward.8} parent=0 // pred_check
    _
  $region11: #{unetpp_efficientnet_forward.8} parent=0 // pred_check_branch
    %13 = sbr.rel (0) target = $region13
  $region12: #{unetpp_efficientnet_forward.8} parent=0 // pred_region
    _
  $region13: #{unetpp_efficientnet_forward.8} parent=0 // pred_fallthru
    _
  %v15 = vld [vmem:[%s0] sm:$0xff]
  %v16 = vld [vmem:[%s0 + $0x8] sm:$0xf]
  %v17 = vld [vmem:[%s1] sm:$0xf]
  %v18 = vld [vmem:[%s1 + $0x4] sm:$0xf]
  %v19 = vld [vmem:[%s1 + $0x8] sm:$0xf]
  %v20 = vld [vmem:[%s1 + $0xc] sm:$0xf]
  %v21 = vld [vmem:[%s1 + $0x10] sm:$0xf]
  %v22 = vld [vmem:[%s1 + $0x14] sm:$0xf]
  %v23 = vld [vmem:[%s1 + $0x18] sm:$0xf]
  %v24 = vld [vmem:[%s1 + $0x1c] sm:$0xf]
  %v25 = vld [vmem:[%s1 + $0x20] sm:$0xf]
  %v26 = vld [vmem:[%s1 + $0x24] sm:$0xf]
  %v27 = vld [vmem:[%s1 + $0x28] sm:$0xf]
  %v28 = vld [vmem:[%s1 + $0x2c] sm:$0xf]
  %v29 = vld [vmem:[%s1 + $0x30] sm:$0xf]
  %v30 = vld [vmem:[%s1 + $0x34] sm:$0xf]
  %v31 = vld [vmem:[%s1 + $0x38] sm:$0xf]
  %v32 = vld [vmem:[%s1 + $0x3c] sm:$0xf]
  %v33 = vld [vmem:[%s1 + $0x40] sm:$0xf]
  %v34 = vld [vmem:[%s1 + $0x44] sm:$0xf]
  %v35 = vld [vmem:[%s1 + $0x48] sm:$0xf]
  %v36 = vld [vmem:[%s1 + $0x4c] sm:$0xf]
  %v37 = vld [vmem:[%s1 + $0x50] sm:$0xf]
  %v38 = vld [vmem:[%s1 + $0x54] sm:$0xf]
  %v39 = vld [vmem:[%s1 + $0x58] sm:$0xf]
  %v40 = vld [vmem:[%s1 + $0x5c] sm:$0xf]
  %v41 = vld [vmem:[%s1 + $0x60] sm:$0xf]
  %v42 = vld [vmem:[%s1 + $0x64] sm:$0xf]
  %v43 = vld [vmem:[%s1 + $0x68] sm:$0xf]
  %v44 = vld [vmem:[%s1 + $0x6c] sm:$0xf]
  %v45 = vld [vmem:[%s1 + $0x70] sm:$0xf]
  %v46 = vld [vmem:[%s1 + $0x74] sm:$0xf]
  %v47 = vld [vmem:[%s1 + $0x78] sm:$0xf]
  %v48 = vld [vmem:[%s1 + $0x7c] sm:$0xf]
  %v49 = vld [vmem:[%s1 + $0x80] sm:$0xf]
  %v50 = vld [vmem:[%s1 + $0x84] sm:$0xf]
  %v51 = vld [vmem:[%s1 + $0x88] sm:$0xf]
  %v52 = vld [vmem:[%s1 + $0x8c] sm:$0xf]
  %v53 = vld [vmem:[%s1 + $0x90] sm:$0xf]
  %v54 = vld [vmem:[%s1 + $0x94] sm:$0xf]
  %v55 = vld [vmem:[%s1 + $0x98] sm:$0xf]
  %v56 = vld [vmem:[%s1 + $0x9c] sm:$0xf]
  %v57 = vld [vmem:[%s1 + $0xa0] sm:$0xf]
  %v58 = vld [vmem:[%s1 + $0xa4] sm:$0xf]
  %v59 = vld [vmem:[%s1 + $0xa8] sm:$0xf]
  %v60 = vld [vmem:[%s1 + $0xac] sm:$0xf]
  %v61 = vld [vmem:[%s1 + $0xb0] sm:$0xf]
  %v62 = vld [vmem:[%s1 + $0xb4] sm:$0xf]
  %v63 = vld [vmem:[%s1 + $0xb8] sm:$0xf]
  %v64 = vld [vmem:[%s1 + $0xbc] sm:$0xf]
  %v65 = vld [vmem:[%s2] sm:$0x1]
  %v67 = vlaneseq
  %v68 = vshrl.u32 %v67, 7
  %v69 = vsub.s32 0, %v68
  %v70 = vrot.slane %v65, %v69
  %v74 = vunpack.c.l.b16 %v15
  %v75 = vunpack.c.h.b16 %v15
  %v76 = vunpack.c.l.b16 %v16
  %v77 = vpack.c.b16 %v74, %v74
  %v78 = vpack.c.b16 %v75, %v75
  %v79 = vpack.c.b16 %v76, %v76
  %v131 = vunpack.c.l.b16 %v17
  %v132 = vunpack.c.l.b16 %v18
  %v133 = vunpack.c.l.b16 %v19
  %v134 = vunpack.c.l.b16 %v20
  %v135 = vunpack.c.l.b16 %v21
  %v136 = vunpack.c.l.b16 %v22
  %v137 = vunpack.c.l.b16 %v23
  %v138 = vunpack.c.l.b16 %v24
  %v139 = vunpack.c.l.b16 %v25
  %v140 = vunpack.c.l.b16 %v26
  %v141 = vunpack.c.l.b16 %v27
  %v142 = vunpack.c.l.b16 %v28
  %v143 = vunpack.c.l.b16 %v29
  %v144 = vunpack.c.l.b16 %v30
  %v145 = vunpack.c.l.b16 %v31
  %v146 = vunpack.c.l.b16 %v32
  %v147 = vunpack.c.l.b16 %v33
  %v148 = vunpack.c.l.b16 %v34
  %v149 = vunpack.c.l.b16 %v35
  %v150 = vunpack.c.l.b16 %v36
  %v151 = vunpack.c.l.b16 %v37
  %v152 = vunpack.c.l.b16 %v38
  %v153 = vunpack.c.l.b16 %v39
  %v154 = vunpack.c.l.b16 %v40
  %v155 = vunpack.c.l.b16 %v41
  %v156 = vunpack.c.l.b16 %v42
  %v157 = vunpack.c.l.b16 %v43
  %v158 = vunpack.c.l.b16 %v44
  %v159 = vunpack.c.l.b16 %v45
  %v160 = vunpack.c.l.b16 %v46
  %v161 = vunpack.c.l.b16 %v47
  %v162 = vunpack.c.l.b16 %v48
  %v163 = vunpack.c.l.b16 %v49
  %v164 = vunpack.c.l.b16 %v50
  %v165 = vunpack.c.l.b16 %v51
  %v166 = vunpack.c.l.b16 %v52
  %v167 = vunpack.c.l.b16 %v53
  %v168 = vunpack.c.l.b16 %v54
  %v169 = vunpack.c.l.b16 %v55
  %v170 = vunpack.c.l.b16 %v56
  %v171 = vunpack.c.l.b16 %v57
  %v172 = vunpack.c.l.b16 %v58
  %v173 = vunpack.c.l.b16 %v59
  %v174 = vunpack.c.l.b16 %v60
  %v175 = vunpack.c.l.b16 %v61
  %v176 = vunpack.c.l.b16 %v62
  %v177 = vunpack.c.l.b16 %v63
  %v178 = vunpack.c.l.b16 %v64
  %v179 = vpack.c.b16 %v132, %v131
  %v180 = vpack.c.b16 %v134, %v133
  %v181 = vpack.c.b16 %v136, %v135
  %v182 = vpack.c.b16 %v138, %v137
  %v183 = vpack.c.b16 %v140, %v139
  %v184 = vpack.c.b16 %v142, %v141
  %v185 = vpack.c.b16 %v144, %v143
  %v186 = vpack.c.b16 %v146, %v145
  %v187 = vpack.c.b16 %v148, %v147
  %v188 = vpack.c.b16 %v150, %v149
  %v189 = vpack.c.b16 %v152, %v151
  %v190 = vpack.c.b16 %v154, %v153
  %v191 = vpack.c.b16 %v156, %v155
  %v192 = vpack.c.b16 %v158, %v157
  %v193 = vpack.c.b16 %v160, %v159
  %v194 = vpack.c.b16 %v162, %v161
  %v195 = vpack.c.b16 %v164, %v163
  %v196 = vpack.c.b16 %v166, %v165
  %v197 = vpack.c.b16 %v168, %v167
  %v198 = vpack.c.b16 %v170, %v169
  %v199 = vpack.c.b16 %v172, %v171
  %v200 = vpack.c.b16 %v174, %v173
  %v201 = vpack.c.b16 %v176, %v175
  %v202 = vpack.c.b16 %v178, %v177
  %227 = vmatprep.subr.bf16.mxu0 0
  %228 = vmatpush1.bf16.msra.mxu0 %v186
  %229 = vmatprep.subr.bf16.mxu0 0
  %230 = vmatpush1.bf16.msra.mxu0 %v185
  %231 = vmatprep.subr.bf16.mxu0 0
  %232 = vmatpush1.bf16.msra.mxu0 %v184
  %233 = vmatprep.subr.bf16.mxu0 0
  %234 = vmatpush1.bf16.msra.mxu0 %v183
  %235 = vmatprep.subr.bf16.mxu0 0
  %236 = vmatpush1.bf16.msra.mxu0 %v182
  %237 = vmatprep.subr.bf16.mxu0 0
  %238 = vmatpush1.bf16.msra.mxu0 %v181
  %239 = vmatprep.subr.bf16.mxu0 0
  %240 = vmatpush1.bf16.msra.mxu0 %v180
  %241 = vmatprep.subr.bf16.mxu0 0
  %242 = vmatpush1.bf16.msra.mxu0 %v179
  %243 = vmatprep.subr.bf16.mxu0 0
  %244 = vmatpush2.bf16.msra.mxu0 %v194
  %245 = vmatprep.subr.bf16.mxu0 0
  %246 = vmatpush2.bf16.msra.mxu0 %v193
  %247 = vmatprep.subr.bf16.mxu0 0
  %248 = vmatpush2.bf16.msra.mxu0 %v192
  %249 = vmatprep.subr.bf16.mxu0 0
  %250 = vmatpush2.bf16.msra.mxu0 %v191
  %251 = vmatprep.subr.bf16.mxu0 0
  %252 = vmatpush2.bf16.msra.mxu0 %v190
  %253 = vmatprep.subr.bf16.mxu0 0
  %254 = vmatpush2.bf16.msra.mxu0 %v189
  %255 = vmatprep.subr.bf16.mxu0 0
  %256 = vmatpush2.bf16.msra.mxu0 %v188
  %257 = vmatprep.subr.bf16.mxu0 0
  %258 = vmatpush2.bf16.msra.mxu0 %v187
  %259 = vmatprep.mubr.bf16.mxu0 %v78
  %260 = vmatmul.mubr.bf16.gmra.mxu0 %v77
  %v261 = vpop.f32.mrf.mxu0
  %v262 = vadd.f32 %v70, %v261
  %v263 = vpop.f32.mrf.mxu0
  %v264 = vpop.f32.mrf.mxu0
  %v265 = vpop.f32.mrf.mxu0
  %266 = vdwg.mxu0
  %267 = vmatprep.subr.bf16.mxu0 0
  %268 = vmatpush1.bf16.msra.mxu0 %v202
  %269 = vmatprep.subr.bf16.mxu0 0
  %270 = vmatpush1.bf16.msra.mxu0 %v201
  %271 = vmatprep.subr.bf16.mxu0 0
  %272 = vmatpush1.bf16.msra.mxu0 %v200
  %273 = vmatprep.subr.bf16.mxu0 0
  %274 = vmatpush1.bf16.msra.mxu0 %v199
  %275 = vmatprep.subr.bf16.mxu0 0
  %276 = vmatpush1.bf16.msra.mxu0 %v198
  %277 = vmatprep.subr.bf16.mxu0 0
  %278 = vmatpush1.bf16.msra.mxu0 %v197
  %279 = vmatprep.subr.bf16.mxu0 0
  %280 = vmatpush1.bf16.msra.mxu0 %v196
  %281 = vmatprep.subr.bf16.mxu0 0
  %282 = vmatpush1.bf16.msra.mxu0 %v195
  %283 = vmatprep.subr.bf16.mxu0 0
  %284 = vmatpush2.bf16.msra.mxu0 0
  %285 = vmatprep.subr.bf16.mxu0 0
  %286 = vmatpush2.bf16.msra.mxu0 0
  %287 = vmatprep.subr.bf16.mxu0 0
  %288 = vmatpush2.bf16.msra.mxu0 0
  %289 = vmatprep.subr.bf16.mxu0 0
  %290 = vmatpush2.bf16.msra.mxu0 0
  %291 = vmatprep.subr.bf16.mxu0 0
  %292 = vmatpush2.bf16.msra.mxu0 0
  %293 = vmatprep.subr.bf16.mxu0 0
  %294 = vmatpush2.bf16.msra.mxu0 0
  %295 = vmatprep.subr.bf16.mxu0 0
  %296 = vmatpush2.bf16.msra.mxu0 0
  %297 = vmatprep.subr.bf16.mxu0 0
  %298 = vmatpush2.bf16.msra.mxu0 0
  %299 = vmatprep.mubr.bf16.mxu0 0
  %300 = vmatmul.mubr.bf16.gmra.mxu0 %v79
  %v301 = vpop.f32.mrf.mxu0
  %v302 = vadd.f32 %v262, %v301
  %v303 = vpop.f32.mrf.mxu0
  %v304 = vpop.f32.mrf.mxu0
  %v305 = vpop.f32.mrf.mxu0
  %306 = vdwg.mxu0
  %v307 = vsub.f32 0.0, %v302
  %v308 = vmul.f32 %v307, 1.442695
  %v309 = vpow.pop %v308
  %v310 = vadd.f32 %v309, 1.0
  %v311 = vrcp.pop %v310
  %v312 = vmul.f32 %v302, %v311
  %v313 = vpack.c.bf16 %v312, %v312
  %314 = vst [vmem:[%s3] sm:$0xf] %v313
  // Predicated region
  $region14: #{unetpp_efficientnet_forward.8} parent=0 // pred_check
    _
  $region15: #{unetpp_efficientnet_forward.8} parent=0 // pred_check_branch
    %316 = sbr.rel (0) target = $region17
  $region16: #{unetpp_efficientnet_forward.8} parent=0 // pred_region
    _
  $region17: #{unetpp_efficientnet_forward.8} parent=0 // pred_fallthru
    _
  // Predicated region
  $region18: #{unetpp_efficientnet_forward.8} parent=0 // pred_check
    _
  $region19: #{unetpp_efficientnet_forward.8} parent=0 // pred_check_branch
    %318 = sbr.rel (0) target = $region21
  $region20: #{unetpp_efficientnet_forward.8} parent=0 // pred_region
    _
  $region21: #{unetpp_efficientnet_forward.8} parent=0 // pred_fallthru
    _

// kernel: unetpp_efficientnet_forward.9
$region0: #{unetpp_efficientnet_forward.9}
  #allocation0 [shape = 'u32[]', space=smem, size = 0x4, offset = 0x4, fixed_abs, tag = 'smem constant byte address 0x4 - core index']
  #allocation1 [shape = 'u32[144,128]{1,0:T(1,128)}', space=vmem, size = 0x12000, scoped, tag = 'internal scratch']
  %s0 = inlined_call_operand.vmem [shape: bf16[8,512], index: 0, kind: input, shape index: {}]
  %s1 = inlined_call_operand.vmem [shape: bf16[512,128], index: 1, kind: input, shape index: {}]
  %s2 = inlined_call_operand.vmem [shape: f32[1,128], index: 2, kind: input, shape index: {}]
  %s3 = inlined_call_operand.vmem [shape: bf16[8,128], index: 3, kind: output, shape index: {}]
  %s4 = sld [smem:[#allocation0]]
  $region22: #{unetpp_efficientnet_forward.9} parent=0
    _
  %s6 = ssub.s32 1, %s4
  %s7 = scalar_select 0, %s6, %s4
  // Predicated region
  $region2: #{unetpp_efficientnet_forward.9} parent=0 // pred_check
    _
  $region3: #{unetpp_efficientnet_forward.9} parent=0 // pred_check_branch
    %9 = sbr.rel (0) target = $region5
  $region4: #{unetpp_efficientnet_forward.9} parent=0 // pred_region
    _
  $region5: #{unetpp_efficientnet_forward.9} parent=0 // pred_fallthru
    _
  // Predicated region
  $region6: #{unetpp_efficientnet_forward.9} parent=0 // pred_check
    _
  $region7: #{unetpp_efficientnet_forward.9} parent=0 // pred_check_branch
    %11 = sbr.rel (0) target = $region9
  $region8: #{unetpp_efficientnet_forward.9} parent=0 // pred_region
    _
  $region9: #{unetpp_efficientnet_forward.9} parent=0 // pred_fallthru
    _
  // Predicated region
  $region10: #{unetpp_efficientnet_forward.9} parent=0 // pred_check
    _
  $region11: #{unetpp_efficientnet_forward.9} parent=0 // pred_check_branch
    %13 = sbr.rel (0) target = $region13
  $region12: #{unetpp_efficientnet_forward.9} parent=0 // pred_region
    _
  $region13: #{unetpp_efficientnet_forward.9} parent=0 // pred_fallthru
    _
  %v15 = vld [vmem:[%s0] sm:$0xff]
  %v16 = vld [vmem:[%s0 + $0x8] sm:$0xff]
  %v17 = vld [vmem:[%s1] sm:$0xf]
  %v18 = vld [vmem:[%s1 + $0x4] sm:$0xf]
  %v19 = vld [vmem:[%s1 + $0x8] sm:$0xf]
  %v20 = vld [vmem:[%s1 + $0xc] sm:$0xf]
  %v21 = vld [vmem:[%s1 + $0x10] sm:$0xf]
  %v22 = vld [vmem:[%s1 + $0x14] sm:$0xf]
  %v23 = vld [vmem:[%s1 + $0x18] sm:$0xf]
  %v24 = vld [vmem:[%s1 + $0x1c] sm:$0xf]
  %v25 = vld [vmem:[%s1 + $0x20] sm:$0xf]
  %v26 = vld [vmem:[%s1 + $0x24] sm:$0xf]
  %v27 = vld [vmem:[%s1 + $0x28] sm:$0xf]
  %v28 = vld [vmem:[%s1 + $0x2c] sm:$0xf]
  %v29 = vld [vmem:[%s1 + $0x30] sm:$0xf]
  %v30 = vld [vmem:[%s1 + $0x34] sm:$0xf]
  %v31 = vld [vmem:[%s1 + $0x38] sm:$0xf]
  %v32 = vld [vmem:[%s1 + $0x3c] sm:$0xf]
  %v33 = vld [vmem:[%s1 + $0x40] sm:$0xf]
  %v34 = vld [vmem:[%s1 + $0x44] sm:$0xf]
  %v35 = vld [vmem:[%s1 + $0x48] sm:$0xf]
  %v36 = vld [vmem:[%s1 + $0x4c] sm:$0xf]
  %v37 = vld [vmem:[%s1 + $0x50] sm:$0xf]
  %v38 = vld [vmem:[%s1 + $0x54] sm:$0xf]
  %v39 = vld [vmem:[%s1 + $0x58] sm:$0xf]
  %v40 = vld [vmem:[%s1 + $0x5c] sm:$0xf]
  %v41 = vld [vmem:[%s1 + $0x60] sm:$0xf]
  %v42 = vld [vmem:[%s1 + $0x64] sm:$0xf]
  %v43 = vld [vmem:[%s1 + $0x68] sm:$0xf]
  %v44 = vld [vmem:[%s1 + $0x6c] sm:$0xf]
  %v45 = vld [vmem:[%s1 + $0x70] sm:$0xf]
  %v46 = vld [vmem:[%s1 + $0x74] sm:$0xf]
  %v47 = vld [vmem:[%s1 + $0x78] sm:$0xf]
  %v48 = vld [vmem:[%s1 + $0x7c] sm:$0xf]
  %v49 = vld [vmem:[%s1 + $0x80] sm:$0xf]
  %v50 = vld [vmem:[%s1 + $0x84] sm:$0xf]
  %v51 = vld [vmem:[%s1 + $0x88] sm:$0xf]
  %v52 = vld [vmem:[%s1 + $0x8c] sm:$0xf]
  %v53 = vld [vmem:[%s1 + $0x90] sm:$0xf]
  %v54 = vld [vmem:[%s1 + $0x94] sm:$0xf]
  %v55 = vld [vmem:[%s1 + $0x98] sm:$0xf]
  %v56 = vld [vmem:[%s1 + $0x9c] sm:$0xf]
  %v57 = vld [vmem:[%s1 + $0xa0] sm:$0xf]
  %v58 = vld [vmem:[%s1 + $0xa4] sm:$0xf]
  %v59 = vld [vmem:[%s1 + $0xa8] sm:$0xf]
  %v60 = vld [vmem:[%s1 + $0xac] sm:$0xf]
  %v61 = vld [vmem:[%s1 + $0xb0] sm:$0xf]
  %v62 = vld [vmem:[%s1 + $0xb4] sm:$0xf]
  %v63 = vld [vmem:[%s1 + $0xb8] sm:$0xf]
  %v64 = vld [vmem:[%s1 + $0xbc] sm:$0xf]
  %v65 = vld [vmem:[%s1 + $0xc0] sm:$0xf]
  %v66 = vld [vmem:[%s1 + $0xc4] sm:$0xf]
  %v67 = vld [vmem:[%s1 + $0xc8] sm:$0xf]
  %v68 = vld [vmem:[%s1 + $0xcc] sm:$0xf]
  %v69 = vld [vmem:[%s1 + $0xd0] sm:$0xf]
  %v70 = vld [vmem:[%s1 + $0xd4] sm:$0xf]
  %v71 = vld [vmem:[%s1 + $0xd8] sm:$0xf]
  %v72 = vld [vmem:[%s1 + $0xdc] sm:$0xf]
  %v73 = vld [vmem:[%s1 + $0xe0] sm:$0xf]
  %v74 = vld [vmem:[%s1 + $0xe4] sm:$0xf]
  %v75 = vld [vmem:[%s1 + $0xe8] sm:$0xf]
  %v76 = vld [vmem:[%s1 + $0xec] sm:$0xf]
  %v77 = vld [vmem:[%s1 + $0xf0] sm:$0xf]
  %v78 = vld [vmem:[%s1 + $0xf4] sm:$0xf]
  %v79 = vld [vmem:[%s1 + $0xf8] sm:$0xf]
  %v80 = vld [vmem:[%s1 + $0xfc] sm:$0xf]
  %v81 = vld [vmem:[%s2] sm:$0x1]
  %v83 = vlaneseq
  %v84 = vshrl.u32 %v83, 7
  %v85 = vsub.s32 0, %v84
  %v86 = vrot.slane %v81, %v85
  %v90 = vunpack.c.l.b16 %v15
  %v91 = vunpack.c.h.b16 %v15
  %v92 = vunpack.c.l.b16 %v16
  %v93 = vunpack.c.h.b16 %v16
  %v94 = vpack.c.b16 %v90, %v90
  %v95 = vpack.c.b16 %v91, %v91
  %v96 = vpack.c.b16 %v92, %v92
  %v97 = vpack.c.b16 %v93, %v93
  %v166 = vunpack.c.l.b16 %v17
  %v167 = vunpack.c.l.b16 %v18
  %v168 = vunpack.c.l.b16 %v19
  %v169 = vunpack.c.l.b16 %v20
  %v170 = vunpack.c.l.b16 %v21
  %v171 = vunpack.c.l.b16 %v22
  %v172 = vunpack.c.l.b16 %v23
  %v173 = vunpack.c.l.b16 %v24
  %v174 = vunpack.c.l.b16 %v25
  %v175 = vunpack.c.l.b16 %v26
  %v176 = vunpack.c.l.b16 %v27
  %v177 = vunpack.c.l.b16 %v28
  %v178 = vunpack.c.l.b16 %v29
  %v179 = vunpack.c.l.b16 %v30
  %v180 = vunpack.c.l.b16 %v31
  %v181 = vunpack.c.l.b16 %v32
  %v182 = vunpack.c.l.b16 %v33
  %v183 = vunpack.c.l.b16 %v34
  %v184 = vunpack.c.l.b16 %v35
  %v185 = vunpack.c.l.b16 %v36
  %v186 = vunpack.c.l.b16 %v37
  %v187 = vunpack.c.l.b16 %v38
  %v188 = vunpack.c.l.b16 %v39
  %v189 = vunpack.c.l.b16 %v40
  %v190 = vunpack.c.l.b16 %v41
  %v191 = vunpack.c.l.b16 %v42
  %v192 = vunpack.c.l.b16 %v43
  %v193 = vunpack.c.l.b16 %v44
  %v194 = vunpack.c.l.b16 %v45
  %v195 = vunpack.c.l.b16 %v46
  %v196 = vunpack.c.l.b16 %v47
  %v197 = vunpack.c.l.b16 %v48
  %v198 = vunpack.c.l.b16 %v49
  %v199 = vunpack.c.l.b16 %v50
  %v200 = vunpack.c.l.b16 %v51
  %v201 = vunpack.c.l.b16 %v52
  %v202 = vunpack.c.l.b16 %v53
  %v203 = vunpack.c.l.b16 %v54
  %v204 = vunpack.c.l.b16 %v55
  %v205 = vunpack.c.l.b16 %v56
  %v206 = vunpack.c.l.b16 %v57
  %v207 = vunpack.c.l.b16 %v58
  %v208 = vunpack.c.l.b16 %v59
  %v209 = vunpack.c.l.b16 %v60
  %v210 = vunpack.c.l.b16 %v61
  %v211 = vunpack.c.l.b16 %v62
  %v212 = vunpack.c.l.b16 %v63
  %v213 = vunpack.c.l.b16 %v64
  %v214 = vunpack.c.l.b16 %v65
  %v215 = vunpack.c.l.b16 %v66
  %v216 = vunpack.c.l.b16 %v67
  %v217 = vunpack.c.l.b16 %v68
  %v218 = vunpack.c.l.b16 %v69
  %v219 = vunpack.c.l.b16 %v70
  %v220 = vunpack.c.l.b16 %v71
  %v221 = vunpack.c.l.b16 %v72
  %v222 = vunpack.c.l.b16 %v73
  %v223 = vunpack.c.l.b16 %v74
  %v224 = vunpack.c.l.b16 %v75
  %v225 = vunpack.c.l.b16 %v76
  %v226 = vunpack.c.l.b16 %v77
  %v227 = vunpack.c.l.b16 %v78
  %v228 = vunpack.c.l.b16 %v79
  %v229 = vunpack.c.l.b16 %v80
  %v230 = vpack.c.b16 %v167, %v166
  %v231 = vpack.c.b16 %v169, %v168
  %v232 = vpack.c.b16 %v171, %v170
  %v233 = vpack.c.b16 %v173, %v172
  %v234 = vpack.c.b16 %v175, %v174
  %v235 = vpack.c.b16 %v177, %v176
  %v236 = vpack.c.b16 %v179, %v178
  %v237 = vpack.c.b16 %v181, %v180
  %v238 = vpack.c.b16 %v183, %v182
  %v239 = vpack.c.b16 %v185, %v184
  %v240 = vpack.c.b16 %v187, %v186
  %v241 = vpack.c.b16 %v189, %v188
  %v242 = vpack.c.b16 %v191, %v190
  %v243 = vpack.c.b16 %v193, %v192
  %v244 = vpack.c.b16 %v195, %v194
  %v245 = vpack.c.b16 %v197, %v196
  %v246 = vpack.c.b16 %v199, %v198
  %v247 = vpack.c.b16 %v201, %v200
  %v248 = vpack.c.b16 %v203, %v202
  %v249 = vpack.c.b16 %v205, %v204
  %v250 = vpack.c.b16 %v207, %v206
  %v251 = vpack.c.b16 %v209, %v208
  %v252 = vpack.c.b16 %v211, %v210
  %v253 = vpack.c.b16 %v213, %v212
  %v254 = vpack.c.b16 %v215, %v214
  %v255 = vpack.c.b16 %v217, %v216
  %v256 = vpack.c.b16 %v219, %v218
  %v257 = vpack.c.b16 %v221, %v220
  %v258 = vpack.c.b16 %v223, %v222
  %v259 = vpack.c.b16 %v225, %v224
  %v260 = vpack.c.b16 %v227, %v226
  %v261 = vpack.c.b16 %v229, %v228
  %294 = vmatprep.subr.bf16.mxu0 0
  %295 = vmatpush1.bf16.msra.mxu0 %v237
  %296 = vmatprep.subr.bf16.mxu0 0
  %297 = vmatpush1.bf16.msra.mxu0 %v236
  %298 = vmatprep.subr.bf16.mxu0 0
  %299 = vmatpush1.bf16.msra.mxu0 %v235
  %300 = vmatprep.subr.bf16.mxu0 0
  %301 = vmatpush1.bf16.msra.mxu0 %v234
  %302 = vmatprep.subr.bf16.mxu0 0
  %303 = vmatpush1.bf16.msra.mxu0 %v233
  %304 = vmatprep.subr.bf16.mxu0 0
  %305 = vmatpush1.bf16.msra.mxu0 %v232
  %306 = vmatprep.subr.bf16.mxu0 0
  %307 = vmatpush1.bf16.msra.mxu0 %v231
  %308 = vmatprep.subr.bf16.mxu0 0
  %309 = vmatpush1.bf16.msra.mxu0 %v230
  %310 = vmatprep.subr.bf16.mxu0 0
  %311 = vmatpush2.bf16.msra.mxu0 %v245
  %312 = vmatprep.subr.bf16.mxu0 0
  %313 = vmatpush2.bf16.msra.mxu0 %v244
  %314 = vmatprep.subr.bf16.mxu0 0
  %315 = vmatpush2.bf16.msra.mxu0 %v243
  %316 = vmatprep.subr.bf16.mxu0 0
  %317 = vmatpush2.bf16.msra.mxu0 %v242
  %318 = vmatprep.subr.bf16.mxu0 0
  %319 = vmatpush2.bf16.msra.mxu0 %v241
  %320 = vmatprep.subr.bf16.mxu0 0
  %321 = vmatpush2.bf16.msra.mxu0 %v240
  %322 = vmatprep.subr.bf16.mxu0 0
  %323 = vmatpush2.bf16.msra.mxu0 %v239
  %324 = vmatprep.subr.bf16.mxu0 0
  %325 = vmatpush2.bf16.msra.mxu0 %v238
  %326 = vmatprep.mubr.bf16.mxu0 %v95
  %327 = vmatmul.mubr.bf16.gmra.mxu0 %v94
  %v328 = vpop.f32.mrf.mxu0
  %v329 = vadd.f32 %v86, %v328
  %v330 = vpop.f32.mrf.mxu0
  %v331 = vpop.f32.mrf.mxu0
  %v332 = vpop.f32.mrf.mxu0
  %333 = vdwg.mxu0
  %334 = vmatprep.subr.bf16.mxu0 0
  %335 = vmatpush1.bf16.msra.mxu0 %v253
  %336 = vmatprep.subr.bf16.mxu0 0
  %337 = vmatpush1.bf16.msra.mxu0 %v252
  %338 = vmatprep.subr.bf16.mxu0 0
  %339 = vmatpush1.bf16.msra.mxu0 %v251
  %340 = vmatprep.subr.bf16.mxu0 0
  %341 = vmatpush1.bf16.msra.mxu0 %v250
  %342 = vmatprep.subr.bf16.mxu0 0
  %343 = vmatpush1.bf16.msra.mxu0 %v249
  %344 = vmatprep.subr.bf16.mxu0 0
  %345 = vmatpush1.bf16.msra.mxu0 %v248
  %346 = vmatprep.subr.bf16.mxu0 0
  %347 = vmatpush1.bf16.msra.mxu0 %v247
  %348 = vmatprep.subr.bf16.mxu0 0
  %349 = vmatpush1.bf16.msra.mxu0 %v246
  %350 = vmatprep.subr.bf16.mxu0 0
  %351 = vmatpush2.bf16.msra.mxu0 %v261
  %352 = vmatprep.subr.bf16.mxu0 0
  %353 = vmatpush2.bf16.msra.mxu0 %v260
  %354 = vmatprep.subr.bf16.mxu0 0
  %355 = vmatpush2.bf16.msra.mxu0 %v259
  %356 = vmatprep.subr.bf16.mxu0 0
  %357 = vmatpush2.bf16.msra.mxu0 %v258
  %358 = vmatprep.subr.bf16.mxu0 0
  %359 = vmatpush2.bf16.msra.mxu0 %v257
  %360 = vmatprep.subr.bf16.mxu0 0
  %361 = vmatpush2.bf16.msra.mxu0 %v256
  %362 = vmatprep.subr.bf16.mxu0 0
  %363 = vmatpush2.bf16.msra.mxu0 %v255
  %364 = vmatprep.subr.bf16.mxu0 0
  %365 = vmatpush2.bf16.msra.mxu0 %v254
  %366 = vmatprep.mubr.bf16.mxu0 %v97
  %367 = vmatmul.mubr.bf16.gmra.mxu0 %v96
  %v368 = vpop.f32.mrf.mxu0
  %v369 = vadd.f32 %v329, %v368
  %v370 = vpop.f32.mrf.mxu0
  %v371 = vpop.f32.mrf.mxu0
  %v372 = vpop.f32.mrf.mxu0
  %373 = vdwg.mxu0
  %v374 = vsub.f32 0.0, %v369
  %v375 = vmul.f32 %v374, 1.442695
  %v376 = vpow.pop %v375
  %v377 = vadd.f32 %v376, 1.0
  %v378 = vrcp.pop %v377
  %v379 = vmul.f32 %v369, %v378
  %v380 = vpack.c.bf16 %v379, %v379
  %381 = vst [vmem:[%s3] sm:$0xf] %v380
  // Predicated region
  $region14: #{unetpp_efficientnet_forward.9} parent=0 // pred_check
    _
  $region15: #{unetpp_efficientnet_forward.9} parent=0 // pred_check_branch
    %383 = sbr.rel (0) target = $region17
  $region16: #{unetpp_efficientnet_forward.9} parent=0 // pred_region
    _
  $region17: #{unetpp_efficientnet_forward.9} parent=0 // pred_fallthru
    _
  // Predicated region
  $region18: #{unetpp_efficientnet_forward.9} parent=0 // pred_check
    _
  $region19: #{unetpp_efficientnet_forward.9} parent=0 // pred_check_branch
    %385 = sbr.rel (0) target = $region21
  $region20: #{unetpp_efficientnet_forward.9} parent=0 // pred_region
    _
  $region21: #{unetpp_efficientnet_forward.9} parent=0 // pred_fallthru
    _

</llo_original>
